<compile_context>
chip_gen: v5e
topology: v5e:2x2
jax: 0.10.0
libtpu: 0.0.40
codegen_flags: <defaults>
</compile_context>

<pallas_src>
import jax
import jax.numpy as jnp
from jax import lax
from jax.experimental import pallas as pl
from jax.experimental.pallas import tpu as pltpu

# --- small, deterministic BERT config ---
VOCAB = 100
MAX_POS = 16
HIDDEN = 32
NUM_HEADS = 2
HEAD_DIM = HIDDEN // NUM_HEADS
INTERMEDIATE = 64
NUM_LAYERS = 2
LN_EPS = 1e-12

# ---------------- packed-slab layouts (static row offsets) ----------------
# Weight slab (bf16), shape (NUM_LAYERS * W_LAYER_ROWS, W_COLS); all blocks
# start at lane 0 and at 16-aligned sublane offsets.
WQ_OFF = 0                                   # per head: (HIDDEN, HEAD_DIM), scale folded
WK_OFF = WQ_OFF + NUM_HEADS * HIDDEN
WV_OFF = WK_OFF + NUM_HEADS * HIDDEN
WO_OFF = WV_OFF + NUM_HEADS * HIDDEN         # per head: (HEAD_DIM, HIDDEN)
WI_OFF = WO_OFF + NUM_HEADS * HEAD_DIM       # (HIDDEN, INTERMEDIATE)
WF_OFF = WI_OFF + HIDDEN                     # (INTERMEDIATE, HIDDEN)
W_LAYER_ROWS = WF_OFF + INTERMEDIATE
W_COLS = INTERMEDIATE                        # 64 lanes

# Bias / LayerNorm vector slab (f32), one parameter vector per row (lane offset 0).
V_EMB_G, V_EMB_B = 0, 1
V_BASE = 2
V_BQ = 0                                     # + h, width HEAD_DIM (scale folded)
V_BK = V_BQ + NUM_HEADS
V_BV = V_BK + NUM_HEADS
V_BO = V_BV + NUM_HEADS                      # width HIDDEN
V_LN1G, V_LN1B = V_BO + 1, V_BO + 2
V_BI, V_BF = V_BO + 3, V_BO + 4              # widths INTERMEDIATE, HIDDEN
V_LN2G, V_LN2B = V_BO + 5, V_BO + 6
V_LAYER_ROWS = V_BO + 7
V_COLS = INTERMEDIATE


def _gelu(x):
    # TODO(synk): original BERT uses exact erf-based GELU; tanh approximation used here.
    return 0.5 * x * (1.0 + jnp.tanh(0.7978845608028654 * (x + 0.044715 * x * x * x)))


# ---------------- Fused Pallas kernel: full encoder forward ----------------
def _bert_encoder_kernel(ids_ref, mask_ref, tab_ref, w_ref, v_ref, o_ref, x_scr):
    B, S = mask_ref.shape
    H, nh, dh = HIDDEN, NUM_HEADS, HEAD_DIM
    f32, bf16 = jnp.float32, jnp.bfloat16

    def vrow(r, width):
        return v_ref[r:r + 1, :width]                       # (1, width) f32, lane offset 0

    def layer_norm(h, g_row, b_row):
        mu = jnp.mean(h, axis=-1, keepdims=True)
        var = jnp.mean(jnp.square(h - mu), axis=-1, keepdims=True)
        return (h - mu) * lax.rsqrt(var + LN_EPS) * vrow(g_row, H) + vrow(b_row, H)

    # ---- embeddings built in-kernel: word gather from SMEM ids + (pos + tok0) rows ----
    for t in range(B * S):
        x_scr[t:t + 1, :] = tab_ref[pl.ds(ids_ref[t], 1), :]
    pos = tab_ref[VOCAB:VOCAB + S, :]                        # (S, H); token-type-0 pre-added
    emb = x_scr[...] + jnp.concatenate([pos] * B, axis=0)
    x = layer_norm(emb, V_EMB_G, V_EMB_B)                    # (B*S, H) f32

    # ---- attention bias from the raw int mask (hoisted out of the layer loop) ----
    neg = (1.0 - mask_ref[...].astype(f32)) * (-10000.0)     # (B, S)
    bias_rows = [neg[b:b + 1, :] for b in range(B)]          # each (1, S)

    for l in range(NUM_LAYERS):                              # fully unrolled (L == 2)
        wb = l * W_LAYER_ROWS
        vb = V_BASE + l * V_LAYER_ROWS
        xb = x.astype(bf16)

        # ---- multi-head self-attention; heads are never concatenated:
        #      attn_b = sum_h softmax(q_bh k_bh^T + bias_b) v_bh @ Wo_h
        attn_rows = [jnp.zeros((S, H), f32) for _ in range(B)]
        for h in range(nh):
            wq = w_ref[wb + WQ_OFF + h * H: wb + WQ_OFF + (h + 1) * H, :dh]
            wk = w_ref[wb + WK_OFF + h * H: wb + WK_OFF + (h + 1) * H, :dh]
            wv = w_ref[wb + WV_OFF + h * H: wb + WV_OFF + (h + 1) * H, :dh]
            wo = w_ref[wb + WO_OFF + h * dh: wb + WO_OFF + (h + 1) * dh, :H]
            q_h = jnp.dot(xb, wq, preferred_element_type=f32) + vrow(vb + V_BQ + h, dh)
            k_h = jnp.dot(xb, wk, preferred_element_type=f32) + vrow(vb + V_BK + h, dh)
            v_h = jnp.dot(xb, wv, preferred_element_type=f32) + vrow(vb + V_BV + h, dh)
            for b in range(B):
                r0, r1 = b * S, (b + 1) * S                  # 8-aligned sublane slices only
                q = q_h[r0:r1].astype(bf16)
                k = k_h[r0:r1].astype(bf16)
                vv = v_h[r0:r1].astype(bf16)
                s = lax.dot_general(q, k, (((1,), (1,)), ((), ())),
                                    preferred_element_type=f32) + bias_rows[b]
                m = jnp.max(s, axis=-1, keepdims=True)
                p = jnp.exp(s - m)
                p = p / jnp.sum(p, axis=-1, keepdims=True)   # exact softmax divide
                ctx = jnp.dot(p.astype(bf16), vv, preferred_element_type=f32)
                attn_rows[b] = attn_rows[b] + jnp.dot(
                    ctx.astype(bf16), wo, preferred_element_type=f32)
        attn = jnp.concatenate(attn_rows, axis=0) + vrow(vb + V_BO, H)
        x = layer_norm(attn + x, vb + V_LN1G, vb + V_LN1B)

        # ---- FFN: wi -> gelu -> wf -> residual -> LayerNorm (fused) ----
        wi = w_ref[wb + WI_OFF: wb + WI_OFF + H, :INTERMEDIATE]
        wf = w_ref[wb + WF_OFF: wb + WF_OFF + INTERMEDIATE, :H]
        inter = _gelu(jnp.dot(x.astype(bf16), wi, preferred_element_type=f32)
                      + vrow(vb + V_BI, INTERMEDIATE))
        ffn = jnp.dot(inter.astype(bf16), wf, preferred_element_type=f32) + vrow(vb + V_BF, H)
        x = layer_norm(ffn + x, vb + V_LN2G, vb + V_LN2B)

    # Single HBM store of the final hidden state.
    # TODO(synk): last dim is HIDDEN=32 (<128 lanes) so the store is lane-masked; the
    # output is only 2 KB, so a lane-dense repack was not worth the in-kernel reshuffle.
    o_ref[...] = x


# ---------------- Parameters (deterministic init) ----------------
def init_params(key):
    keys = iter(jax.random.split(key, 8 + 12 * NUM_LAYERS))

    def dense(fan_in, fan_out):
        w = 0.02 * jax.random.normal(next(keys), (fan_in, fan_out), jnp.float32)
        b = jnp.zeros((fan_out,), jnp.float32)
        return w, b

    params = {
        "word_emb": 0.02 * jax.random.normal(next(keys), (VOCAB, HIDDEN), jnp.float32),
        "pos_emb": 0.02 * jax.random.normal(next(keys), (MAX_POS, HIDDEN), jnp.float32),
        "tok_emb": 0.02 * jax.random.normal(next(keys), (2, HIDDEN), jnp.float32),
        "emb_ln_g": jnp.ones((HIDDEN,), jnp.float32),
        "emb_ln_b": jnp.zeros((HIDDEN,), jnp.float32),
        "layers": [],
    }
    for _ in range(NUM_LAYERS):
        lyr = {}
        lyr["wq"], lyr["bq"] = dense(HIDDEN, HIDDEN)
        lyr["wk"], lyr["bk"] = dense(HIDDEN, HIDDEN)
        lyr["wv"], lyr["bv"] = dense(HIDDEN, HIDDEN)
        lyr["wo"], lyr["bo"] = dense(HIDDEN, HIDDEN)
        lyr["ln1_g"] = jnp.ones((HIDDEN,), jnp.float32)
        lyr["ln1_b"] = jnp.zeros((HIDDEN,), jnp.float32)
        lyr["wi"], lyr["bi"] = dense(HIDDEN, INTERMEDIATE)
        lyr["wf"], lyr["bf"] = dense(INTERMEDIATE, HIDDEN)
        lyr["ln2_g"] = jnp.ones((HIDDEN,), jnp.float32)
        lyr["ln2_b"] = jnp.zeros((HIDDEN,), jnp.float32)
        params["layers"].append(lyr)
    return params


def pack_params(params):
    """Pack all parameters into three slabs: f32 embedding table (word | pos+tok0),
    bf16 weight slab (per-head pre-split, 1/sqrt(dh) folded into Q), f32 bias/LN slab."""
    scale = HEAD_DIM ** -0.5
    w = jnp.zeros((NUM_LAYERS * W_LAYER_ROWS, W_COLS), jnp.float32)
    v = jnp.zeros((V_BASE + NUM_LAYERS * V_LAYER_ROWS, V_COLS), jnp.float32)
    v = v.at[V_EMB_G, :HIDDEN].set(params["emb_ln_g"])
    v = v.at[V_EMB_B, :HIDDEN].set(params["emb_ln_b"])
    for l, lyr in enumerate(params["layers"]):
        wb = l * W_LAYER_ROWS
        vb = V_BASE + l * V_LAYER_ROWS
        for h in range(NUM_HEADS):
            c = slice(h * HEAD_DIM, (h + 1) * HEAD_DIM)
            w = w.at[wb + WQ_OFF + h * HIDDEN: wb + WQ_OFF + (h + 1) * HIDDEN,
                     :HEAD_DIM].set(lyr["wq"][:, c] * scale)
            w = w.at[wb + WK_OFF + h * HIDDEN: wb + WK_OFF + (h + 1) * HIDDEN,
                     :HEAD_DIM].set(lyr["wk"][:, c])
            w = w.at[wb + WV_OFF + h * HIDDEN: wb + WV_OFF + (h + 1) * HIDDEN,
                     :HEAD_DIM].set(lyr["wv"][:, c])
            w = w.at[wb + WO_OFF + h * HEAD_DIM: wb + WO_OFF + (h + 1) * HEAD_DIM,
                     :HIDDEN].set(lyr["wo"][c, :])
            v = v.at[vb + V_BQ + h, :HEAD_DIM].set(lyr["bq"][c] * scale)
            v = v.at[vb + V_BK + h, :HEAD_DIM].set(lyr["bk"][c])
            v = v.at[vb + V_BV + h, :HEAD_DIM].set(lyr["bv"][c])
        w = w.at[wb + WI_OFF: wb + WI_OFF + HIDDEN, :INTERMEDIATE].set(lyr["wi"])
        w = w.at[wb + WF_OFF: wb + WF_OFF + INTERMEDIATE, :HIDDEN].set(lyr["wf"])
        v = v.at[vb + V_BO, :HIDDEN].set(lyr["bo"])
        v = v.at[vb + V_LN1G, :HIDDEN].set(lyr["ln1_g"])
        v = v.at[vb + V_LN1B, :HIDDEN].set(lyr["ln1_b"])
        v = v.at[vb + V_BI, :INTERMEDIATE].set(lyr["bi"])
        v = v.at[vb + V_BF, :HIDDEN].set(lyr["bf"])
        v = v.at[vb + V_LN2G, :HIDDEN].set(lyr["ln2_g"])
        v = v.at[vb + V_LN2B, :HIDDEN].set(lyr["ln2_b"])
    tab = jnp.concatenate(
        [params["word_emb"], params["pos_emb"] + params["tok_emb"][0][None, :]], axis=0)
    return {"tab": tab, "w": w.astype(jnp.bfloat16), "v": v}


# ------------- Forward (matches BertTextProcessor.forward semantics) -------------
def bert_text_processor(packed, q_input_ids, q_input_mask):
    """Returns the last encoder layer hidden states, shape (B, S, HIDDEN)."""
    B, S = q_input_ids.shape
    assert S <= MAX_POS
    ids_flat = q_input_ids.reshape(B * S).astype(jnp.int32)   # SMEM scalar-prefetch arg
    mask = q_input_mask.astype(jnp.int32)                     # bias built in-kernel

    grid_spec = pltpu.PrefetchScalarGridSpec(
        num_scalar_prefetch=1,                                 # ids -> SMEM
        grid=(),
        in_specs=[
            pl.BlockSpec(memory_space=pltpu.MemorySpace.VMEM),  # mask
            pl.BlockSpec(memory_space=pltpu.MemorySpace.VMEM),  # embedding table
            pl.BlockSpec(memory_space=pltpu.MemorySpace.VMEM),  # bf16 weight slab
            pl.BlockSpec(memory_space=pltpu.MemorySpace.VMEM),  # f32 bias/LN slab
        ],
        out_specs=pl.BlockSpec(memory_space=pltpu.MemorySpace.VMEM),
        scratch_shapes=[pltpu.VMEM((B * S, HIDDEN), jnp.float32)],
    )
    out = pl.pallas_call(
        _bert_encoder_kernel,
        out_shape=jax.ShapeDtypeStruct((B * S, HIDDEN), jnp.float32),
        grid_spec=grid_spec,
    )(ids_flat, mask, packed["tab"], packed["w"], packed["v"])

    # output_all_encoded_layers=False -> only the last encoder layer is returned.
    return out.reshape(B, S, HIDDEN)


if __name__ == "__main__":
    key = jax.random.PRNGKey(0)
    pkey, ikey = jax.random.split(key)
    params = init_params(pkey)
    packed = pack_params(params)

    B, S = 2, 8
    q_input_ids = jax.random.randint(ikey, (B, S), 0, VOCAB, dtype=jnp.int32)
    q_input_mask = jnp.array(
        [[1, 1, 1, 1, 1, 1, 1, 1],
         [1, 1, 1, 1, 1, 0, 0, 0]], dtype=jnp.int32)

    fwd = jax.jit(bert_text_processor)
    out = fwd(packed, q_input_ids, q_input_mask)
    out = jax.block_until_ready(out)
    assert out.shape == (B, S, HIDDEN) and out.dtype == jnp.float32
    assert bool(jnp.all(jnp.isfinite(out)))
    print("KERNEL_OK")
</pallas_src>

<mosaic_0001>
module attributes {stable_mosaic.version = 11 : i64} {
  func.func @_bert_encoder_kernel(%arg0: memref<16xi32, #tpu.memory_space<smem>>, %arg1: memref<2x8xi32, #tpu.memory_space<vmem>>, %arg2: memref<116x32xf32, #tpu.memory_space<vmem>>, %arg3: memref<640x64xbf16, #tpu.memory_space<vmem>>, %arg4: memref<28x64xf32, #tpu.memory_space<vmem>>, %arg5: memref<16x32xf32, #tpu.memory_space<vmem>>, %arg6: memref<16x32xf32, #tpu.memory_space<vmem>>) attributes {dimension_semantics = [], scalar_prefetch = 1 : i64, scratch_operands = 1 : i64, tpu.core_type = #tpu.core_type<tc>} {
    %c0 = arith.constant 0 : index
    %0 = memref.load %arg0[%c0] : memref<16xi32, #tpu.memory_space<smem>>
    %1 = arith.index_cast %0 : i32 to index
    %c0_0 = arith.constant 0 : index
    %2 = vector.load %arg2[%1, %c0_0] : memref<116x32xf32, #tpu.memory_space<vmem>>, vector<1x32xf32>
    %c0_1 = arith.constant 0 : index
    %c0_2 = arith.constant 0 : index
    %3 = vector.load %arg6[%c0_1, %c0_2] : memref<16x32xf32, #tpu.memory_space<vmem>>, vector<1x32xf32>
    tpu.vector_store %arg6[%c0_1, %c0_2], %2 {strides = array<i32>} : memref<16x32xf32, #tpu.memory_space<vmem>>, vector<1x32xf32>,
    %c1 = arith.constant 1 : index
    %4 = memref.load %arg0[%c1] : memref<16xi32, #tpu.memory_space<smem>>
    %5 = arith.index_cast %4 : i32 to index
    %c0_3 = arith.constant 0 : index
    %6 = vector.load %arg2[%5, %c0_3] : memref<116x32xf32, #tpu.memory_space<vmem>>, vector<1x32xf32>
    %c1_4 = arith.constant 1 : index
    %c0_5 = arith.constant 0 : index
    %7 = vector.load %arg6[%c1_4, %c0_5] : memref<16x32xf32, #tpu.memory_space<vmem>>, vector<1x32xf32>
    tpu.vector_store %arg6[%c1_4, %c0_5], %6 {strides = array<i32>} : memref<16x32xf32, #tpu.memory_space<vmem>>, vector<1x32xf32>,
    %c2 = arith.constant 2 : index
    %8 = memref.load %arg0[%c2] : memref<16xi32, #tpu.memory_space<smem>>
    %9 = arith.index_cast %8 : i32 to index
    %c0_6 = arith.constant 0 : index
    %10 = vector.load %arg2[%9, %c0_6] : memref<116x32xf32, #tpu.memory_space<vmem>>, vector<1x32xf32>
    %c2_7 = arith.constant 2 : index
    %c0_8 = arith.constant 0 : index
    %11 = vector.load %arg6[%c2_7, %c0_8] : memref<16x32xf32, #tpu.memory_space<vmem>>, vector<1x32xf32>
    tpu.vector_store %arg6[%c2_7, %c0_8], %10 {strides = array<i32>} : memref<16x32xf32, #tpu.memory_space<vmem>>, vector<1x32xf32>,
    %c3 = arith.constant 3 : index
    %12 = memref.load %arg0[%c3] : memref<16xi32, #tpu.memory_space<smem>>
    %13 = arith.index_cast %12 : i32 to index
    %c0_9 = arith.constant 0 : index
    %14 = vector.load %arg2[%13, %c0_9] : memref<116x32xf32, #tpu.memory_space<vmem>>, vector<1x32xf32>
    %c3_10 = arith.constant 3 : index
    %c0_11 = arith.constant 0 : index
    %15 = vector.load %arg6[%c3_10, %c0_11] : memref<16x32xf32, #tpu.memory_space<vmem>>, vector<1x32xf32>
    tpu.vector_store %arg6[%c3_10, %c0_11], %14 {strides = array<i32>} : memref<16x32xf32, #tpu.memory_space<vmem>>, vector<1x32xf32>,
    %c4 = arith.constant 4 : index
    %16 = memref.load %arg0[%c4] : memref<16xi32, #tpu.memory_space<smem>>
    %17 = arith.index_cast %16 : i32 to index
    %c0_12 = arith.constant 0 : index
    %18 = vector.load %arg2[%17, %c0_12] : memref<116x32xf32, #tpu.memory_space<vmem>>, vector<1x32xf32>
    %c4_13 = arith.constant 4 : index
    %c0_14 = arith.constant 0 : index
    %19 = vector.load %arg6[%c4_13, %c0_14] : memref<16x32xf32, #tpu.memory_space<vmem>>, vector<1x32xf32>
    tpu.vector_store %arg6[%c4_13, %c0_14], %18 {strides = array<i32>} : memref<16x32xf32, #tpu.memory_space<vmem>>, vector<1x32xf32>,
    %c5 = arith.constant 5 : index
    %20 = memref.load %arg0[%c5] : memref<16xi32, #tpu.memory_space<smem>>
    %21 = arith.index_cast %20 : i32 to index
    %c0_15 = arith.constant 0 : index
    %22 = vector.load %arg2[%21, %c0_15] : memref<116x32xf32, #tpu.memory_space<vmem>>, vector<1x32xf32>
    %c5_16 = arith.constant 5 : index
    %c0_17 = arith.constant 0 : index
    %23 = vector.load %arg6[%c5_16, %c0_17] : memref<16x32xf32, #tpu.memory_space<vmem>>, vector<1x32xf32>
    tpu.vector_store %arg6[%c5_16, %c0_17], %22 {strides = array<i32>} : memref<16x32xf32, #tpu.memory_space<vmem>>, vector<1x32xf32>,
    %c6 = arith.constant 6 : index
    %24 = memref.load %arg0[%c6] : memref<16xi32, #tpu.memory_space<smem>>
    %25 = arith.index_cast %24 : i32 to index
    %c0_18 = arith.constant 0 : index
    %26 = vector.load %arg2[%25, %c0_18] : memref<116x32xf32, #tpu.memory_space<vmem>>, vector<1x32xf32>
    %c6_19 = arith.constant 6 : index
    %c0_20 = arith.constant 0 : index
    %27 = vector.load %arg6[%c6_19, %c0_20] : memref<16x32xf32, #tpu.memory_space<vmem>>, vector<1x32xf32>
    tpu.vector_store %arg6[%c6_19, %c0_20], %26 {strides = array<i32>} : memref<16x32xf32, #tpu.memory_space<vmem>>, vector<1x32xf32>,
    %c7 = arith.constant 7 : index
    %28 = memref.load %arg0[%c7] : memref<16xi32, #tpu.memory_space<smem>>
    %29 = arith.index_cast %28 : i32 to index
    %c0_21 = arith.constant 0 : index
    %30 = vector.load %arg2[%29, %c0_21] : memref<116x32xf32, #tpu.memory_space<vmem>>, vector<1x32xf32>
    %c7_22 = arith.constant 7 : index
    %c0_23 = arith.constant 0 : index
    %31 = vector.load %arg6[%c7_22, %c0_23] : memref<16x32xf32, #tpu.memory_space<vmem>>, vector<1x32xf32>
    tpu.vector_store %arg6[%c7_22, %c0_23], %30 {strides = array<i32>} : memref<16x32xf32, #tpu.memory_space<vmem>>, vector<1x32xf32>,
    %c8 = arith.constant 8 : index
    %32 = memref.load %arg0[%c8] : memref<16xi32, #tpu.memory_space<smem>>
    %33 = arith.index_cast %32 : i32 to index
    %c0_24 = arith.constant 0 : index
    %34 = vector.load %arg2[%33, %c0_24] : memref<116x32xf32, #tpu.memory_space<vmem>>, vector<1x32xf32>
    %c8_25 = arith.constant 8 : index
    %c0_26 = arith.constant 0 : index
    %35 = vector.load %arg6[%c8_25, %c0_26] : memref<16x32xf32, #tpu.memory_space<vmem>>, vector<1x32xf32>
    tpu.vector_store %arg6[%c8_25, %c0_26], %34 {strides = array<i32>} : memref<16x32xf32, #tpu.memory_space<vmem>>, vector<1x32xf32>,
    %c9 = arith.constant 9 : index
    %36 = memref.load %arg0[%c9] : memref<16xi32, #tpu.memory_space<smem>>
    %37 = arith.index_cast %36 : i32 to index
    %c0_27 = arith.constant 0 : index
    %38 = vector.load %arg2[%37, %c0_27] : memref<116x32xf32, #tpu.memory_space<vmem>>, vector<1x32xf32>
    %c9_28 = arith.constant 9 : index
    %c0_29 = arith.constant 0 : index
    %39 = vector.load %arg6[%c9_28, %c0_29] : memref<16x32xf32, #tpu.memory_space<vmem>>, vector<1x32xf32>
    tpu.vector_store %arg6[%c9_28, %c0_29], %38 {strides = array<i32>} : memref<16x32xf32, #tpu.memory_space<vmem>>, vector<1x32xf32>,
    %c10 = arith.constant 10 : index
    %40 = memref.load %arg0[%c10] : memref<16xi32, #tpu.memory_space<smem>>
    %41 = arith.index_cast %40 : i32 to index
    %c0_30 = arith.constant 0 : index
    %42 = vector.load %arg2[%41, %c0_30] : memref<116x32xf32, #tpu.memory_space<vmem>>, vector<1x32xf32>
    %c10_31 = arith.constant 10 : index
    %c0_32 = arith.constant 0 : index
    %43 = vector.load %arg6[%c10_31, %c0_32] : memref<16x32xf32, #tpu.memory_space<vmem>>, vector<1x32xf32>
    tpu.vector_store %arg6[%c10_31, %c0_32], %42 {strides = array<i32>} : memref<16x32xf32, #tpu.memory_space<vmem>>, vector<1x32xf32>,
    %c11 = arith.constant 11 : index
    %44 = memref.load %arg0[%c11] : memref<16xi32, #tpu.memory_space<smem>>
    %45 = arith.index_cast %44 : i32 to index
    %c0_33 = arith.constant 0 : index
    %46 = vector.load %arg2[%45, %c0_33] : memref<116x32xf32, #tpu.memory_space<vmem>>, vector<1x32xf32>
    %c11_34 = arith.constant 11 : index
    %c0_35 = arith.constant 0 : index
    %47 = vector.load %arg6[%c11_34, %c0_35] : memref<16x32xf32, #tpu.memory_space<vmem>>, vector<1x32xf32>
    tpu.vector_store %arg6[%c11_34, %c0_35], %46 {strides = array<i32>} : memref<16x32xf32, #tpu.memory_space<vmem>>, vector<1x32xf32>,
    %c12 = arith.constant 12 : index
    %48 = memref.load %arg0[%c12] : memref<16xi32, #tpu.memory_space<smem>>
    %49 = arith.index_cast %48 : i32 to index
    %c0_36 = arith.constant 0 : index
    %50 = vector.load %arg2[%49, %c0_36] : memref<116x32xf32, #tpu.memory_space<vmem>>, vector<1x32xf32>
    %c12_37 = arith.constant 12 : index
    %c0_38 = arith.constant 0 : index
    %51 = vector.load %arg6[%c12_37, %c0_38] : memref<16x32xf32, #tpu.memory_space<vmem>>, vector<1x32xf32>
    tpu.vector_store %arg6[%c12_37, %c0_38], %50 {strides = array<i32>} : memref<16x32xf32, #tpu.memory_space<vmem>>, vector<1x32xf32>,
    %c13 = arith.constant 13 : index
    %52 = memref.load %arg0[%c13] : memref<16xi32, #tpu.memory_space<smem>>
    %53 = arith.index_cast %52 : i32 to index
    %c0_39 = arith.constant 0 : index
    %54 = vector.load %arg2[%53, %c0_39] : memref<116x32xf32, #tpu.memory_space<vmem>>, vector<1x32xf32>
    %c13_40 = arith.constant 13 : index
    %c0_41 = arith.constant 0 : index
    %55 = vector.load %arg6[%c13_40, %c0_41] : memref<16x32xf32, #tpu.memory_space<vmem>>, vector<1x32xf32>
    tpu.vector_store %arg6[%c13_40, %c0_41], %54 {strides = array<i32>} : memref<16x32xf32, #tpu.memory_space<vmem>>, vector<1x32xf32>,
    %c14 = arith.constant 14 : index
    %56 = memref.load %arg0[%c14] : memref<16xi32, #tpu.memory_space<smem>>
    %57 = arith.index_cast %56 : i32 to index
    %c0_42 = arith.constant 0 : index
    %58 = vector.load %arg2[%57, %c0_42] : memref<116x32xf32, #tpu.memory_space<vmem>>, vector<1x32xf32>
    %c14_43 = arith.constant 14 : index
    %c0_44 = arith.constant 0 : index
    %59 = vector.load %arg6[%c14_43, %c0_44] : memref<16x32xf32, #tpu.memory_space<vmem>>, vector<1x32xf32>
    tpu.vector_store %arg6[%c14_43, %c0_44], %58 {strides = array<i32>} : memref<16x32xf32, #tpu.memory_space<vmem>>, vector<1x32xf32>,
    %c15 = arith.constant 15 : index
    %60 = memref.load %arg0[%c15] : memref<16xi32, #tpu.memory_space<smem>>
    %61 = arith.index_cast %60 : i32 to index
    %c0_45 = arith.constant 0 : index
    %62 = vector.load %arg2[%61, %c0_45] : memref<116x32xf32, #tpu.memory_space<vmem>>, vector<1x32xf32>
    %c15_46 = arith.constant 15 : index
    %c0_47 = arith.constant 0 : index
    %63 = vector.load %arg6[%c15_46, %c0_47] : memref<16x32xf32, #tpu.memory_space<vmem>>, vector<1x32xf32>
    tpu.vector_store %arg6[%c15_46, %c0_47], %62 {strides = array<i32>} : memref<16x32xf32, #tpu.memory_space<vmem>>, vector<1x32xf32>,
    %c100 = arith.constant 100 : index
    %c0_48 = arith.constant 0 : index
    %64 = vector.load %arg2[%c100, %c0_48] : memref<116x32xf32, #tpu.memory_space<vmem>>, vector<8x32xf32>
    %c0_49 = arith.constant 0 : index
    %c0_50 = arith.constant 0 : index
    %65 = vector.load %arg6[%c0_49, %c0_50] : memref<16x32xf32, #tpu.memory_space<vmem>>, vector<16x32xf32>
    %66 = tpu.concatenate %64, %64 in 0 : vector<8x32xf32>, vector<8x32xf32> -> vector<16x32xf32>
    %67 = arith.addf %65, %66 : vector<16x32xf32>
    %cst = arith.constant dense<0.000000e+00> : vector<16xf32>
    %68 = vector.multi_reduction <add>, %67, %cst [1] : vector<16x32xf32> to vector<16xf32>
    %69 = vector.shape_cast %68 : vector<16xf32> to vector<16x1xf32>
    %cst_51 = arith.constant 3.200000e+01 : f32
    %70 = vector.broadcast %cst_51 : f32 to vector<16x1xf32>
    %71 = arith.divf %69, %70 : vector<16x1xf32>
    %72 = vector.broadcast %71 : vector<16x1xf32> to vector<16x32xf32>
    %73 = arith.subf %67, %72 : vector<16x32xf32>
    %74 = arith.mulf %73, %73 : vector<16x32xf32>
    %cst_52 = arith.constant dense<0.000000e+00> : vector<16xf32>
    %75 = vector.multi_reduction <add>, %74, %cst_52 [1] : vector<16x32xf32> to vector<16xf32>
    %76 = vector.shape_cast %75 : vector<16xf32> to vector<16x1xf32>
    %cst_53 = arith.constant 3.200000e+01 : f32
    %77 = vector.broadcast %cst_53 : f32 to vector<16x1xf32>
    %78 = arith.divf %76, %77 : vector<16x1xf32>
    %79 = vector.broadcast %71 : vector<16x1xf32> to vector<16x32xf32>
    %80 = arith.subf %67, %79 : vector<16x32xf32>
    %cst_54 = arith.constant 9.99999996E-13 : f32
    %81 = vector.broadcast %cst_54 : f32 to vector<16x1xf32>
    %82 = arith.addf %78, %81 : vector<16x1xf32>
    %83 = math.rsqrt %82 : vector<16x1xf32>
    %84 = vector.broadcast %83 : vector<16x1xf32> to vector<16x32xf32>
    %85 = arith.mulf %80, %84 : vector<16x32xf32>
    %c0_55 = arith.constant 0 : index
    %c0_56 = arith.constant 0 : index
    %86 = vector.load %arg4[%c0_55, %c0_56] : memref<28x64xf32, #tpu.memory_space<vmem>>, vector<1x32xf32>
    %87 = vector.broadcast %86 : vector<1x32xf32> to vector<16x32xf32>
    %88 = arith.mulf %85, %87 : vector<16x32xf32>
    %c1_57 = arith.constant 1 : index
    %c0_58 = arith.constant 0 : index
    %89 = vector.load %arg4[%c1_57, %c0_58] : memref<28x64xf32, #tpu.memory_space<vmem>>, vector<1x32xf32>
    %90 = vector.broadcast %89 : vector<1x32xf32> to vector<16x32xf32>
    %91 = arith.addf %88, %90 : vector<16x32xf32>
    %c0_59 = arith.constant 0 : index
    %c0_60 = arith.constant 0 : index
    %92 = vector.load %arg1[%c0_59, %c0_60] : memref<2x8xi32, #tpu.memory_space<vmem>>, vector<2x8xi32>
    %93 = arith.sitofp %92 : vector<2x8xi32> to vector<2x8xf32>
    %cst_61 = arith.constant 1.000000e+00 : f32
    %94 = vector.broadcast %cst_61 : f32 to vector<2x8xf32>
    %95 = arith.subf %94, %93 : vector<2x8xf32>
    %cst_62 = arith.constant -1.000000e+04 : f32
    %96 = vector.broadcast %cst_62 : f32 to vector<2x8xf32>
    %97 = arith.mulf %95, %96 : vector<2x8xf32>
    %98 = vector.extract_strided_slice %97 {offsets = [0, 0], sizes = [1, 8], strides = [1, 1]} : vector<2x8xf32> to vector<1x8xf32>
    %99 = vector.extract_strided_slice %97 {offsets = [1, 0], sizes = [1, 8], strides = [1, 1]} : vector<2x8xf32> to vector<1x8xf32>
    %100 = arith.truncf %91 : vector<16x32xf32> to vector<16x32xbf16>
    %cst_63 = arith.constant 0.000000e+00 : f32
    %101 = vector.broadcast %cst_63 : f32 to vector<8x32xf32>
    %cst_64 = arith.constant 0.000000e+00 : f32
    %102 = vector.broadcast %cst_64 : f32 to vector<8x32xf32>
    %c0_65 = arith.constant 0 : index
    %c0_66 = arith.constant 0 : index
    %103 = vector.load %arg3[%c0_65, %c0_66] : memref<640x64xbf16, #tpu.memory_space<vmem>>, vector<32x16xbf16>
    %c64 = arith.constant 64 : index
    %c0_67 = arith.constant 0 : index
    %104 = vector.load %arg3[%c64, %c0_67] : memref<640x64xbf16, #tpu.memory_space<vmem>>, vector<32x16xbf16>
    %c128 = arith.constant 128 : index
    %c0_68 = arith.constant 0 : index
    %105 = vector.load %arg3[%c128, %c0_68] : memref<640x64xbf16, #tpu.memory_space<vmem>>, vector<32x16xbf16>
    %c192 = arith.constant 192 : index
    %c0_69 = arith.constant 0 : index
    %106 = vector.load %arg3[%c192, %c0_69] : memref<640x64xbf16, #tpu.memory_space<vmem>>, vector<16x32xbf16>
    %cst_70 = arith.constant dense<0.000000e+00> : vector<16x16xf32>
    %107 = tpu.matmul %100, %103, %cst_70 {dimension_numbers = #tpu.dot_dimension_numbers<[1], [0], [0], [1], [0, 0, 1, 1], [], []>} : vector<16x32xbf16>, vector<32x16xbf16>, vector<16x16xf32> -> vector<16x16xf32>
    %c2_71 = arith.constant 2 : index
    %c0_72 = arith.constant 0 : index
    %108 = vector.load %arg4[%c2_71, %c0_72] : memref<28x64xf32, #tpu.memory_space<vmem>>, vector<1x16xf32>
    %109 = vector.broadcast %108 : vector<1x16xf32> to vector<16x16xf32>
    %110 = arith.addf %107, %109 : vector<16x16xf32>
    %cst_73 = arith.constant dense<0.000000e+00> : vector<16x16xf32>
    %111 = tpu.matmul %100, %104, %cst_73 {dimension_numbers = #tpu.dot_dimension_numbers<[1], [0], [0], [1], [0, 0, 1, 1], [], []>} : vector<16x32xbf16>, vector<32x16xbf16>, vector<16x16xf32> -> vector<16x16xf32>
    %c4_74 = arith.constant 4 : index
    %c0_75 = arith.constant 0 : index
    %112 = vector.load %arg4[%c4_74, %c0_75] : memref<28x64xf32, #tpu.memory_space<vmem>>, vector<1x16xf32>
    %113 = vector.broadcast %112 : vector<1x16xf32> to vector<16x16xf32>
    %114 = arith.addf %111, %113 : vector<16x16xf32>
    %cst_76 = arith.constant dense<0.000000e+00> : vector<16x16xf32>
    %115 = tpu.matmul %100, %105, %cst_76 {dimension_numbers = #tpu.dot_dimension_numbers<[1], [0], [0], [1], [0, 0, 1, 1], [], []>} : vector<16x32xbf16>, vector<32x16xbf16>, vector<16x16xf32> -> vector<16x16xf32>
    %c6_77 = arith.constant 6 : index
    %c0_78 = arith.constant 0 : index
    %116 = vector.load %arg4[%c6_77, %c0_78] : memref<28x64xf32, #tpu.memory_space<vmem>>, vector<1x16xf32>
    %117 = vector.broadcast %116 : vector<1x16xf32> to vector<16x16xf32>
    %118 = arith.addf %115, %117 : vector<16x16xf32>
    %119 = vector.extract_strided_slice %110 {offsets = [0, 0], sizes = [8, 16], strides = [1, 1]} : vector<16x16xf32> to vector<8x16xf32>
    %120 = arith.truncf %119 : vector<8x16xf32> to vector<8x16xbf16>
    %121 = vector.extract_strided_slice %114 {offsets = [0, 0], sizes = [8, 16], strides = [1, 1]} : vector<16x16xf32> to vector<8x16xf32>
    %122 = arith.truncf %121 : vector<8x16xf32> to vector<8x16xbf16>
    %123 = vector.extract_strided_slice %118 {offsets = [0, 0], sizes = [8, 16], strides = [1, 1]} : vector<16x16xf32> to vector<8x16xf32>
    %124 = arith.truncf %123 : vector<8x16xf32> to vector<8x16xbf16>
    %cst_79 = arith.constant dense<0.000000e+00> : vector<8x8xf32>
    %125 = tpu.matmul %120, %122, %cst_79 {dimension_numbers = #tpu.dot_dimension_numbers<[1], [1], [0], [0], [0, 0, 1, 0], [], []>} : vector<8x16xbf16>, vector<8x16xbf16>, vector<8x8xf32> -> vector<8x8xf32>
    %126 = vector.broadcast %98 : vector<1x8xf32> to vector<8x8xf32>
    %127 = arith.addf %125, %126 : vector<8x8xf32>
    %cst_80 = arith.constant dense<0xFF800000> : vector<8xf32>
    %128 = vector.multi_reduction <maximumf>, %127, %cst_80 [1] : vector<8x8xf32> to vector<8xf32>
    %129 = vector.shape_cast %128 : vector<8xf32> to vector<8x1xf32>
    %130 = vector.broadcast %129 : vector<8x1xf32> to vector<8x8xf32>
    %131 = arith.subf %127, %130 : vector<8x8xf32>
    %132 = math.exp %131 : vector<8x8xf32>
    %cst_81 = arith.constant dense<0.000000e+00> : vector<8xf32>
    %133 = vector.multi_reduction <add>, %132, %cst_81 [1] : vector<8x8xf32> to vector<8xf32>
    %134 = vector.shape_cast %133 : vector<8xf32> to vector<8x1xf32>
    %135 = vector.broadcast %134 : vector<8x1xf32> to vector<8x8xf32>
    %136 = arith.divf %132, %135 : vector<8x8xf32>
    %137 = arith.truncf %136 : vector<8x8xf32> to vector<8x8xbf16>
    %cst_82 = arith.constant dense<0.000000e+00> : vector<8x16xf32>
    %138 = tpu.matmul %137, %124, %cst_82 {dimension_numbers = #tpu.dot_dimension_numbers<[1], [0], [0], [1], [0, 0, 1, 1], [], []>} : vector<8x8xbf16>, vector<8x16xbf16>, vector<8x16xf32> -> vector<8x16xf32>
    %139 = arith.truncf %138 : vector<8x16xf32> to vector<8x16xbf16>
    %cst_83 = arith.constant dense<0.000000e+00> : vector<8x32xf32>
    %140 = tpu.matmul %139, %106, %cst_83 {dimension_numbers = #tpu.dot_dimension_numbers<[1], [0], [0], [1], [0, 0, 1, 1], [], []>} : vector<8x16xbf16>, vector<16x32xbf16>, vector<8x32xf32> -> vector<8x32xf32>
    %141 = arith.addf %101, %140 : vector<8x32xf32>
    %142 = vector.extract_strided_slice %110 {offsets = [8, 0], sizes = [8, 16], strides = [1, 1]} : vector<16x16xf32> to vector<8x16xf32>
    %143 = arith.truncf %142 : vector<8x16xf32> to vector<8x16xbf16>
    %144 = vector.extract_strided_slice %114 {offsets = [8, 0], sizes = [8, 16], strides = [1, 1]} : vector<16x16xf32> to vector<8x16xf32>
    %145 = arith.truncf %144 : vector<8x16xf32> to vector<8x16xbf16>
    %146 = vector.extract_strided_slice %118 {offsets = [8, 0], sizes = [8, 16], strides = [1, 1]} : vector<16x16xf32> to vector<8x16xf32>
    %147 = arith.truncf %146 : vector<8x16xf32> to vector<8x16xbf16>
    %cst_84 = arith.constant dense<0.000000e+00> : vector<8x8xf32>
    %148 = tpu.matmul %143, %145, %cst_84 {dimension_numbers = #tpu.dot_dimension_numbers<[1], [1], [0], [0], [0, 0, 1, 0], [], []>} : vector<8x16xbf16>, vector<8x16xbf16>, vector<8x8xf32> -> vector<8x8xf32>
    %149 = vector.broadcast %99 : vector<1x8xf32> to vector<8x8xf32>
    %150 = arith.addf %148, %149 : vector<8x8xf32>
    %cst_85 = arith.constant dense<0xFF800000> : vector<8xf32>
    %151 = vector.multi_reduction <maximumf>, %150, %cst_85 [1] : vector<8x8xf32> to vector<8xf32>
    %152 = vector.shape_cast %151 : vector<8xf32> to vector<8x1xf32>
    %153 = vector.broadcast %152 : vector<8x1xf32> to vector<8x8xf32>
    %154 = arith.subf %150, %153 : vector<8x8xf32>
    %155 = math.exp %154 : vector<8x8xf32>
    %cst_86 = arith.constant dense<0.000000e+00> : vector<8xf32>
    %156 = vector.multi_reduction <add>, %155, %cst_86 [1] : vector<8x8xf32> to vector<8xf32>
    %157 = vector.shape_cast %156 : vector<8xf32> to vector<8x1xf32>
    %158 = vector.broadcast %157 : vector<8x1xf32> to vector<8x8xf32>
    %159 = arith.divf %155, %158 : vector<8x8xf32>
    %160 = arith.truncf %159 : vector<8x8xf32> to vector<8x8xbf16>
    %cst_87 = arith.constant dense<0.000000e+00> : vector<8x16xf32>
    %161 = tpu.matmul %160, %147, %cst_87 {dimension_numbers = #tpu.dot_dimension_numbers<[1], [0], [0], [1], [0, 0, 1, 1], [], []>} : vector<8x8xbf16>, vector<8x16xbf16>, vector<8x16xf32> -> vector<8x16xf32>
    %162 = arith.truncf %161 : vector<8x16xf32> to vector<8x16xbf16>
    %cst_88 = arith.constant dense<0.000000e+00> : vector<8x32xf32>
    %163 = tpu.matmul %162, %106, %cst_88 {dimension_numbers = #tpu.dot_dimension_numbers<[1], [0], [0], [1], [0, 0, 1, 1], [], []>} : vector<8x16xbf16>, vector<16x32xbf16>, vector<8x32xf32> -> vector<8x32xf32>
    %164 = arith.addf %102, %163 : vector<8x32xf32>
    %c32 = arith.constant 32 : index
    %c0_89 = arith.constant 0 : index
    %165 = vector.load %arg3[%c32, %c0_89] : memref<640x64xbf16, #tpu.memory_space<vmem>>, vector<32x16xbf16>
    %c96 = arith.constant 96 : index
    %c0_90 = arith.constant 0 : index
    %166 = vector.load %arg3[%c96, %c0_90] : memref<640x64xbf16, #tpu.memory_space<vmem>>, vector<32x16xbf16>
    %c160 = arith.constant 160 : index
    %c0_91 = arith.constant 0 : index
    %167 = vector.load %arg3[%c160, %c0_91] : memref<640x64xbf16, #tpu.memory_space<vmem>>, vector<32x16xbf16>
    %c208 = arith.constant 208 : index
    %c0_92 = arith.constant 0 : index
    %168 = vector.load %arg3[%c208, %c0_92] : memref<640x64xbf16, #tpu.memory_space<vmem>>, vector<16x32xbf16>
    %cst_93 = arith.constant dense<0.000000e+00> : vector<16x16xf32>
    %169 = tpu.matmul %100, %165, %cst_93 {dimension_numbers = #tpu.dot_dimension_numbers<[1], [0], [0], [1], [0, 0, 1, 1], [], []>} : vector<16x32xbf16>, vector<32x16xbf16>, vector<16x16xf32> -> vector<16x16xf32>
    %c3_94 = arith.constant 3 : index
    %c0_95 = arith.constant 0 : index
    %170 = vector.load %arg4[%c3_94, %c0_95] : memref<28x64xf32, #tpu.memory_space<vmem>>, vector<1x16xf32>
    %171 = vector.broadcast %170 : vector<1x16xf32> to vector<16x16xf32>
    %172 = arith.addf %169, %171 : vector<16x16xf32>
    %cst_96 = arith.constant dense<0.000000e+00> : vector<16x16xf32>
    %173 = tpu.matmul %100, %166, %cst_96 {dimension_numbers = #tpu.dot_dimension_numbers<[1], [0], [0], [1], [0, 0, 1, 1], [], []>} : vector<16x32xbf16>, vector<32x16xbf16>, vector<16x16xf32> -> vector<16x16xf32>
    %c5_97 = arith.constant 5 : index
    %c0_98 = arith.constant 0 : index
    %174 = vector.load %arg4[%c5_97, %c0_98] : memref<28x64xf32, #tpu.memory_space<vmem>>, vector<1x16xf32>
    %175 = vector.broadcast %174 : vector<1x16xf32> to vector<16x16xf32>
    %176 = arith.addf %173, %175 : vector<16x16xf32>
    %cst_99 = arith.constant dense<0.000000e+00> : vector<16x16xf32>
    %177 = tpu.matmul %100, %167, %cst_99 {dimension_numbers = #tpu.dot_dimension_numbers<[1], [0], [0], [1], [0, 0, 1, 1], [], []>} : vector<16x32xbf16>, vector<32x16xbf16>, vector<16x16xf32> -> vector<16x16xf32>
    %c7_100 = arith.constant 7 : index
    %c0_101 = arith.constant 0 : index
    %178 = vector.load %arg4[%c7_100, %c0_101] : memref<28x64xf32, #tpu.memory_space<vmem>>, vector<1x16xf32>
    %179 = vector.broadcast %178 : vector<1x16xf32> to vector<16x16xf32>
    %180 = arith.addf %177, %179 : vector<16x16xf32>
    %181 = vector.extract_strided_slice %172 {offsets = [0, 0], sizes = [8, 16], strides = [1, 1]} : vector<16x16xf32> to vector<8x16xf32>
    %182 = arith.truncf %181 : vector<8x16xf32> to vector<8x16xbf16>
    %183 = vector.extract_strided_slice %176 {offsets = [0, 0], sizes = [8, 16], strides = [1, 1]} : vector<16x16xf32> to vector<8x16xf32>
    %184 = arith.truncf %183 : vector<8x16xf32> to vector<8x16xbf16>
    %185 = vector.extract_strided_slice %180 {offsets = [0, 0], sizes = [8, 16], strides = [1, 1]} : vector<16x16xf32> to vector<8x16xf32>
    %186 = arith.truncf %185 : vector<8x16xf32> to vector<8x16xbf16>
    %cst_102 = arith.constant dense<0.000000e+00> : vector<8x8xf32>
    %187 = tpu.matmul %182, %184, %cst_102 {dimension_numbers = #tpu.dot_dimension_numbers<[1], [1], [0], [0], [0, 0, 1, 0], [], []>} : vector<8x16xbf16>, vector<8x16xbf16>, vector<8x8xf32> -> vector<8x8xf32>
    %188 = vector.broadcast %98 : vector<1x8xf32> to vector<8x8xf32>
    %189 = arith.addf %187, %188 : vector<8x8xf32>
    %cst_103 = arith.constant dense<0xFF800000> : vector<8xf32>
    %190 = vector.multi_reduction <maximumf>, %189, %cst_103 [1] : vector<8x8xf32> to vector<8xf32>
    %191 = vector.shape_cast %190 : vector<8xf32> to vector<8x1xf32>
    %192 = vector.broadcast %191 : vector<8x1xf32> to vector<8x8xf32>
    %193 = arith.subf %189, %192 : vector<8x8xf32>
    %194 = math.exp %193 : vector<8x8xf32>
    %cst_104 = arith.constant dense<0.000000e+00> : vector<8xf32>
    %195 = vector.multi_reduction <add>, %194, %cst_104 [1] : vector<8x8xf32> to vector<8xf32>
    %196 = vector.shape_cast %195 : vector<8xf32> to vector<8x1xf32>
    %197 = vector.broadcast %196 : vector<8x1xf32> to vector<8x8xf32>
    %198 = arith.divf %194, %197 : vector<8x8xf32>
    %199 = arith.truncf %198 : vector<8x8xf32> to vector<8x8xbf16>
    %cst_105 = arith.constant dense<0.000000e+00> : vector<8x16xf32>
    %200 = tpu.matmul %199, %186, %cst_105 {dimension_numbers = #tpu.dot_dimension_numbers<[1], [0], [0], [1], [0, 0, 1, 1], [], []>} : vector<8x8xbf16>, vector<8x16xbf16>, vector<8x16xf32> -> vector<8x16xf32>
    %201 = arith.truncf %200 : vector<8x16xf32> to vector<8x16xbf16>
    %cst_106 = arith.constant dense<0.000000e+00> : vector<8x32xf32>
    %202 = tpu.matmul %201, %168, %cst_106 {dimension_numbers = #tpu.dot_dimension_numbers<[1], [0], [0], [1], [0, 0, 1, 1], [], []>} : vector<8x16xbf16>, vector<16x32xbf16>, vector<8x32xf32> -> vector<8x32xf32>
    %203 = arith.addf %141, %202 : vector<8x32xf32>
    %204 = vector.extract_strided_slice %172 {offsets = [8, 0], sizes = [8, 16], strides = [1, 1]} : vector<16x16xf32> to vector<8x16xf32>
    %205 = arith.truncf %204 : vector<8x16xf32> to vector<8x16xbf16>
    %206 = vector.extract_strided_slice %176 {offsets = [8, 0], sizes = [8, 16], strides = [1, 1]} : vector<16x16xf32> to vector<8x16xf32>
    %207 = arith.truncf %206 : vector<8x16xf32> to vector<8x16xbf16>
    %208 = vector.extract_strided_slice %180 {offsets = [8, 0], sizes = [8, 16], strides = [1, 1]} : vector<16x16xf32> to vector<8x16xf32>
    %209 = arith.truncf %208 : vector<8x16xf32> to vector<8x16xbf16>
    %cst_107 = arith.constant dense<0.000000e+00> : vector<8x8xf32>
    %210 = tpu.matmul %205, %207, %cst_107 {dimension_numbers = #tpu.dot_dimension_numbers<[1], [1], [0], [0], [0, 0, 1, 0], [], []>} : vector<8x16xbf16>, vector<8x16xbf16>, vector<8x8xf32> -> vector<8x8xf32>
    %211 = vector.broadcast %99 : vector<1x8xf32> to vector<8x8xf32>
    %212 = arith.addf %210, %211 : vector<8x8xf32>
    %cst_108 = arith.constant dense<0xFF800000> : vector<8xf32>
    %213 = vector.multi_reduction <maximumf>, %212, %cst_108 [1] : vector<8x8xf32> to vector<8xf32>
    %214 = vector.shape_cast %213 : vector<8xf32> to vector<8x1xf32>
    %215 = vector.broadcast %214 : vector<8x1xf32> to vector<8x8xf32>
    %216 = arith.subf %212, %215 : vector<8x8xf32>
    %217 = math.exp %216 : vector<8x8xf32>
    %cst_109 = arith.constant dense<0.000000e+00> : vector<8xf32>
    %218 = vector.multi_reduction <add>, %217, %cst_109 [1] : vector<8x8xf32> to vector<8xf32>
    %219 = vector.shape_cast %218 : vector<8xf32> to vector<8x1xf32>
    %220 = vector.broadcast %219 : vector<8x1xf32> to vector<8x8xf32>
    %221 = arith.divf %217, %220 : vector<8x8xf32>
    %222 = arith.truncf %221 : vector<8x8xf32> to vector<8x8xbf16>
    %cst_110 = arith.constant dense<0.000000e+00> : vector<8x16xf32>
    %223 = tpu.matmul %222, %209, %cst_110 {dimension_numbers = #tpu.dot_dimension_numbers<[1], [0], [0], [1], [0, 0, 1, 1], [], []>} : vector<8x8xbf16>, vector<8x16xbf16>, vector<8x16xf32> -> vector<8x16xf32>
    %224 = arith.truncf %223 : vector<8x16xf32> to vector<8x16xbf16>
    %cst_111 = arith.constant dense<0.000000e+00> : vector<8x32xf32>
    %225 = tpu.matmul %224, %168, %cst_111 {dimension_numbers = #tpu.dot_dimension_numbers<[1], [0], [0], [1], [0, 0, 1, 1], [], []>} : vector<8x16xbf16>, vector<16x32xbf16>, vector<8x32xf32> -> vector<8x32xf32>
    %226 = arith.addf %164, %225 : vector<8x32xf32>
    %227 = tpu.concatenate %203, %226 in 0 : vector<8x32xf32>, vector<8x32xf32> -> vector<16x32xf32>
    %c8_112 = arith.constant 8 : index
    %c0_113 = arith.constant 0 : index
    %228 = vector.load %arg4[%c8_112, %c0_113] : memref<28x64xf32, #tpu.memory_space<vmem>>, vector<1x32xf32>
    %229 = vector.broadcast %228 : vector<1x32xf32> to vector<16x32xf32>
    %230 = arith.addf %227, %229 : vector<16x32xf32>
    %231 = arith.addf %230, %91 : vector<16x32xf32>
    %cst_114 = arith.constant dense<0.000000e+00> : vector<16xf32>
    %232 = vector.multi_reduction <add>, %231, %cst_114 [1] : vector<16x32xf32> to vector<16xf32>
    %233 = vector.shape_cast %232 : vector<16xf32> to vector<16x1xf32>
    %cst_115 = arith.constant 3.200000e+01 : f32
    %234 = vector.broadcast %cst_115 : f32 to vector<16x1xf32>
    %235 = arith.divf %233, %234 : vector<16x1xf32>
    %236 = vector.broadcast %235 : vector<16x1xf32> to vector<16x32xf32>
    %237 = arith.subf %231, %236 : vector<16x32xf32>
    %238 = arith.mulf %237, %237 : vector<16x32xf32>
    %cst_116 = arith.constant dense<0.000000e+00> : vector<16xf32>
    %239 = vector.multi_reduction <add>, %238, %cst_116 [1] : vector<16x32xf32> to vector<16xf32>
    %240 = vector.shape_cast %239 : vector<16xf32> to vector<16x1xf32>
    %cst_117 = arith.constant 3.200000e+01 : f32
    %241 = vector.broadcast %cst_117 : f32 to vector<16x1xf32>
    %242 = arith.divf %240, %241 : vector<16x1xf32>
    %243 = vector.broadcast %235 : vector<16x1xf32> to vector<16x32xf32>
    %244 = arith.subf %231, %243 : vector<16x32xf32>
    %cst_118 = arith.constant 9.99999996E-13 : f32
    %245 = vector.broadcast %cst_118 : f32 to vector<16x1xf32>
    %246 = arith.addf %242, %245 : vector<16x1xf32>
    %247 = math.rsqrt %246 : vector<16x1xf32>
    %248 = vector.broadcast %247 : vector<16x1xf32> to vector<16x32xf32>
    %249 = arith.mulf %244, %248 : vector<16x32xf32>
    %c9_119 = arith.constant 9 : index
    %c0_120 = arith.constant 0 : index
    %250 = vector.load %arg4[%c9_119, %c0_120] : memref<28x64xf32, #tpu.memory_space<vmem>>, vector<1x32xf32>
    %251 = vector.broadcast %250 : vector<1x32xf32> to vector<16x32xf32>
    %252 = arith.mulf %249, %251 : vector<16x32xf32>
    %c10_121 = arith.constant 10 : index
    %c0_122 = arith.constant 0 : index
    %253 = vector.load %arg4[%c10_121, %c0_122] : memref<28x64xf32, #tpu.memory_space<vmem>>, vector<1x32xf32>
    %254 = vector.broadcast %253 : vector<1x32xf32> to vector<16x32xf32>
    %255 = arith.addf %252, %254 : vector<16x32xf32>
    %c224 = arith.constant 224 : index
    %c0_123 = arith.constant 0 : index
    %256 = vector.load %arg3[%c224, %c0_123] : memref<640x64xbf16, #tpu.memory_space<vmem>>, vector<32x64xbf16>
    %c256 = arith.constant 256 : index
    %c0_124 = arith.constant 0 : index
    %257 = vector.load %arg3[%c256, %c0_124] : memref<640x64xbf16, #tpu.memory_space<vmem>>, vector<64x32xbf16>
    %258 = arith.truncf %255 : vector<16x32xf32> to vector<16x32xbf16>
    %cst_125 = arith.constant dense<0.000000e+00> : vector<16x64xf32>
    %259 = tpu.matmul %258, %256, %cst_125 {dimension_numbers = #tpu.dot_dimension_numbers<[1], [0], [0], [1], [0, 0, 1, 1], [], []>} : vector<16x32xbf16>, vector<32x64xbf16>, vector<16x64xf32> -> vector<16x64xf32>
    %c11_126 = arith.constant 11 : index
    %c0_127 = arith.constant 0 : index
    %260 = vector.load %arg4[%c11_126, %c0_127] : memref<28x64xf32, #tpu.memory_space<vmem>>, vector<1x64xf32>
    %261 = vector.broadcast %260 : vector<1x64xf32> to vector<16x64xf32>
    %262 = arith.addf %259, %261 : vector<16x64xf32>
    %cst_128 = arith.constant 5.000000e-01 : f32
    %263 = vector.broadcast %cst_128 : f32 to vector<16x64xf32>
    %264 = arith.mulf %263, %262 : vector<16x64xf32>
    %cst_129 = arith.constant 4.471500e-02 : f32
    %265 = vector.broadcast %cst_129 : f32 to vector<16x64xf32>
    %266 = arith.mulf %265, %262 : vector<16x64xf32>
    %267 = arith.mulf %266, %262 : vector<16x64xf32>
    %268 = arith.mulf %267, %262 : vector<16x64xf32>
    %269 = arith.addf %262, %268 : vector<16x64xf32>
    %cst_130 = arith.constant 0.797884583 : f32
    %270 = vector.broadcast %cst_130 : f32 to vector<16x64xf32>
    %271 = arith.mulf %270, %269 : vector<16x64xf32>
    %272 = math.tanh %271 : vector<16x64xf32>
    %cst_131 = arith.constant 1.000000e+00 : f32
    %273 = vector.broadcast %cst_131 : f32 to vector<16x64xf32>
    %274 = arith.addf %273, %272 : vector<16x64xf32>
    %275 = arith.mulf %264, %274 : vector<16x64xf32>
    %276 = arith.truncf %275 : vector<16x64xf32> to vector<16x64xbf16>
    %cst_132 = arith.constant dense<0.000000e+00> : vector<16x32xf32>
    %277 = tpu.matmul %276, %257, %cst_132 {dimension_numbers = #tpu.dot_dimension_numbers<[1], [0], [0], [1], [0, 0, 1, 1], [], []>} : vector<16x64xbf16>, vector<64x32xbf16>, vector<16x32xf32> -> vector<16x32xf32>
    %c12_133 = arith.constant 12 : index
    %c0_134 = arith.constant 0 : index
    %278 = vector.load %arg4[%c12_133, %c0_134] : memref<28x64xf32, #tpu.memory_space<vmem>>, vector<1x32xf32>
    %279 = vector.broadcast %278 : vector<1x32xf32> to vector<16x32xf32>
    %280 = arith.addf %277, %279 : vector<16x32xf32>
    %281 = arith.addf %280, %255 : vector<16x32xf32>
    %cst_135 = arith.constant dense<0.000000e+00> : vector<16xf32>
    %282 = vector.multi_reduction <add>, %281, %cst_135 [1] : vector<16x32xf32> to vector<16xf32>
    %283 = vector.shape_cast %282 : vector<16xf32> to vector<16x1xf32>
    %cst_136 = arith.constant 3.200000e+01 : f32
    %284 = vector.broadcast %cst_136 : f32 to vector<16x1xf32>
    %285 = arith.divf %283, %284 : vector<16x1xf32>
    %286 = vector.broadcast %285 : vector<16x1xf32> to vector<16x32xf32>
    %287 = arith.subf %281, %286 : vector<16x32xf32>
    %288 = arith.mulf %287, %287 : vector<16x32xf32>
    %cst_137 = arith.constant dense<0.000000e+00> : vector<16xf32>
    %289 = vector.multi_reduction <add>, %288, %cst_137 [1] : vector<16x32xf32> to vector<16xf32>
    %290 = vector.shape_cast %289 : vector<16xf32> to vector<16x1xf32>
    %cst_138 = arith.constant 3.200000e+01 : f32
    %291 = vector.broadcast %cst_138 : f32 to vector<16x1xf32>
    %292 = arith.divf %290, %291 : vector<16x1xf32>
    %293 = vector.broadcast %285 : vector<16x1xf32> to vector<16x32xf32>
    %294 = arith.subf %281, %293 : vector<16x32xf32>
    %cst_139 = arith.constant 9.99999996E-13 : f32
    %295 = vector.broadcast %cst_139 : f32 to vector<16x1xf32>
    %296 = arith.addf %292, %295 : vector<16x1xf32>
    %297 = math.rsqrt %296 : vector<16x1xf32>
    %298 = vector.broadcast %297 : vector<16x1xf32> to vector<16x32xf32>
    %299 = arith.mulf %294, %298 : vector<16x32xf32>
    %c13_140 = arith.constant 13 : index
    %c0_141 = arith.constant 0 : index
    %300 = vector.load %arg4[%c13_140, %c0_141] : memref<28x64xf32, #tpu.memory_space<vmem>>, vector<1x32xf32>
    %301 = vector.broadcast %300 : vector<1x32xf32> to vector<16x32xf32>
    %302 = arith.mulf %299, %301 : vector<16x32xf32>
    %c14_142 = arith.constant 14 : index
    %c0_143 = arith.constant 0 : index
    %303 = vector.load %arg4[%c14_142, %c0_143] : memref<28x64xf32, #tpu.memory_space<vmem>>, vector<1x32xf32>
    %304 = vector.broadcast %303 : vector<1x32xf32> to vector<16x32xf32>
    %305 = arith.addf %302, %304 : vector<16x32xf32>
    %306 = arith.truncf %305 : vector<16x32xf32> to vector<16x32xbf16>
    %cst_144 = arith.constant 0.000000e+00 : f32
    %307 = vector.broadcast %cst_144 : f32 to vector<8x32xf32>
    %cst_145 = arith.constant 0.000000e+00 : f32
    %308 = vector.broadcast %cst_145 : f32 to vector<8x32xf32>
    %c320 = arith.constant 320 : index
    %c0_146 = arith.constant 0 : index
    %309 = vector.load %arg3[%c320, %c0_146] : memref<640x64xbf16, #tpu.memory_space<vmem>>, vector<32x16xbf16>
    %c384 = arith.constant 384 : index
    %c0_147 = arith.constant 0 : index
    %310 = vector.load %arg3[%c384, %c0_147] : memref<640x64xbf16, #tpu.memory_space<vmem>>, vector<32x16xbf16>
    %c448 = arith.constant 448 : index
    %c0_148 = arith.constant 0 : index
    %311 = vector.load %arg3[%c448, %c0_148] : memref<640x64xbf16, #tpu.memory_space<vmem>>, vector<32x16xbf16>
    %c512 = arith.constant 512 : index
    %c0_149 = arith.constant 0 : index
    %312 = vector.load %arg3[%c512, %c0_149] : memref<640x64xbf16, #tpu.memory_space<vmem>>, vector<16x32xbf16>
    %cst_150 = arith.constant dense<0.000000e+00> : vector<16x16xf32>
    %313 = tpu.matmul %306, %309, %cst_150 {dimension_numbers = #tpu.dot_dimension_numbers<[1], [0], [0], [1], [0, 0, 1, 1], [], []>} : vector<16x32xbf16>, vector<32x16xbf16>, vector<16x16xf32> -> vector<16x16xf32>
    %c15_151 = arith.constant 15 : index
    %c0_152 = arith.constant 0 : index
    %314 = vector.load %arg4[%c15_151, %c0_152] : memref<28x64xf32, #tpu.memory_space<vmem>>, vector<1x16xf32>
    %315 = vector.broadcast %314 : vector<1x16xf32> to vector<16x16xf32>
    %316 = arith.addf %313, %315 : vector<16x16xf32>
    %cst_153 = arith.constant dense<0.000000e+00> : vector<16x16xf32>
    %317 = tpu.matmul %306, %310, %cst_153 {dimension_numbers = #tpu.dot_dimension_numbers<[1], [0], [0], [1], [0, 0, 1, 1], [], []>} : vector<16x32xbf16>, vector<32x16xbf16>, vector<16x16xf32> -> vector<16x16xf32>
    %c17 = arith.constant 17 : index
    %c0_154 = arith.constant 0 : index
    %318 = vector.load %arg4[%c17, %c0_154] : memref<28x64xf32, #tpu.memory_space<vmem>>, vector<1x16xf32>
    %319 = vector.broadcast %318 : vector<1x16xf32> to vector<16x16xf32>
    %320 = arith.addf %317, %319 : vector<16x16xf32>
    %cst_155 = arith.constant dense<0.000000e+00> : vector<16x16xf32>
    %321 = tpu.matmul %306, %311, %cst_155 {dimension_numbers = #tpu.dot_dimension_numbers<[1], [0], [0], [1], [0, 0, 1, 1], [], []>} : vector<16x32xbf16>, vector<32x16xbf16>, vector<16x16xf32> -> vector<16x16xf32>
    %c19 = arith.constant 19 : index
    %c0_156 = arith.constant 0 : index
    %322 = vector.load %arg4[%c19, %c0_156] : memref<28x64xf32, #tpu.memory_space<vmem>>, vector<1x16xf32>
    %323 = vector.broadcast %322 : vector<1x16xf32> to vector<16x16xf32>
    %324 = arith.addf %321, %323 : vector<16x16xf32>
    %325 = vector.extract_strided_slice %316 {offsets = [0, 0], sizes = [8, 16], strides = [1, 1]} : vector<16x16xf32> to vector<8x16xf32>
    %326 = arith.truncf %325 : vector<8x16xf32> to vector<8x16xbf16>
    %327 = vector.extract_strided_slice %320 {offsets = [0, 0], sizes = [8, 16], strides = [1, 1]} : vector<16x16xf32> to vector<8x16xf32>
    %328 = arith.truncf %327 : vector<8x16xf32> to vector<8x16xbf16>
    %329 = vector.extract_strided_slice %324 {offsets = [0, 0], sizes = [8, 16], strides = [1, 1]} : vector<16x16xf32> to vector<8x16xf32>
    %330 = arith.truncf %329 : vector<8x16xf32> to vector<8x16xbf16>
    %cst_157 = arith.constant dense<0.000000e+00> : vector<8x8xf32>
    %331 = tpu.matmul %326, %328, %cst_157 {dimension_numbers = #tpu.dot_dimension_numbers<[1], [1], [0], [0], [0, 0, 1, 0], [], []>} : vector<8x16xbf16>, vector<8x16xbf16>, vector<8x8xf32> -> vector<8x8xf32>
    %332 = vector.broadcast %98 : vector<1x8xf32> to vector<8x8xf32>
    %333 = arith.addf %331, %332 : vector<8x8xf32>
    %cst_158 = arith.constant dense<0xFF800000> : vector<8xf32>
    %334 = vector.multi_reduction <maximumf>, %333, %cst_158 [1] : vector<8x8xf32> to vector<8xf32>
    %335 = vector.shape_cast %334 : vector<8xf32> to vector<8x1xf32>
    %336 = vector.broadcast %335 : vector<8x1xf32> to vector<8x8xf32>
    %337 = arith.subf %333, %336 : vector<8x8xf32>
    %338 = math.exp %337 : vector<8x8xf32>
    %cst_159 = arith.constant dense<0.000000e+00> : vector<8xf32>
    %339 = vector.multi_reduction <add>, %338, %cst_159 [1] : vector<8x8xf32> to vector<8xf32>
    %340 = vector.shape_cast %339 : vector<8xf32> to vector<8x1xf32>
    %341 = vector.broadcast %340 : vector<8x1xf32> to vector<8x8xf32>
    %342 = arith.divf %338, %341 : vector<8x8xf32>
    %343 = arith.truncf %342 : vector<8x8xf32> to vector<8x8xbf16>
    %cst_160 = arith.constant dense<0.000000e+00> : vector<8x16xf32>
    %344 = tpu.matmul %343, %330, %cst_160 {dimension_numbers = #tpu.dot_dimension_numbers<[1], [0], [0], [1], [0, 0, 1, 1], [], []>} : vector<8x8xbf16>, vector<8x16xbf16>, vector<8x16xf32> -> vector<8x16xf32>
    %345 = arith.truncf %344 : vector<8x16xf32> to vector<8x16xbf16>
    %cst_161 = arith.constant dense<0.000000e+00> : vector<8x32xf32>
    %346 = tpu.matmul %345, %312, %cst_161 {dimension_numbers = #tpu.dot_dimension_numbers<[1], [0], [0], [1], [0, 0, 1, 1], [], []>} : vector<8x16xbf16>, vector<16x32xbf16>, vector<8x32xf32> -> vector<8x32xf32>
    %347 = arith.addf %307, %346 : vector<8x32xf32>
    %348 = vector.extract_strided_slice %316 {offsets = [8, 0], sizes = [8, 16], strides = [1, 1]} : vector<16x16xf32> to vector<8x16xf32>
    %349 = arith.truncf %348 : vector<8x16xf32> to vector<8x16xbf16>
    %350 = vector.extract_strided_slice %320 {offsets = [8, 0], sizes = [8, 16], strides = [1, 1]} : vector<16x16xf32> to vector<8x16xf32>
    %351 = arith.truncf %350 : vector<8x16xf32> to vector<8x16xbf16>
    %352 = vector.extract_strided_slice %324 {offsets = [8, 0], sizes = [8, 16], strides = [1, 1]} : vector<16x16xf32> to vector<8x16xf32>
    %353 = arith.truncf %352 : vector<8x16xf32> to vector<8x16xbf16>
    %cst_162 = arith.constant dense<0.000000e+00> : vector<8x8xf32>
    %354 = tpu.matmul %349, %351, %cst_162 {dimension_numbers = #tpu.dot_dimension_numbers<[1], [1], [0], [0], [0, 0, 1, 0], [], []>} : vector<8x16xbf16>, vector<8x16xbf16>, vector<8x8xf32> -> vector<8x8xf32>
    %355 = vector.broadcast %99 : vector<1x8xf32> to vector<8x8xf32>
    %356 = arith.addf %354, %355 : vector<8x8xf32>
    %cst_163 = arith.constant dense<0xFF800000> : vector<8xf32>
    %357 = vector.multi_reduction <maximumf>, %356, %cst_163 [1] : vector<8x8xf32> to vector<8xf32>
    %358 = vector.shape_cast %357 : vector<8xf32> to vector<8x1xf32>
    %359 = vector.broadcast %358 : vector<8x1xf32> to vector<8x8xf32>
    %360 = arith.subf %356, %359 : vector<8x8xf32>
    %361 = math.exp %360 : vector<8x8xf32>
    %cst_164 = arith.constant dense<0.000000e+00> : vector<8xf32>
    %362 = vector.multi_reduction <add>, %361, %cst_164 [1] : vector<8x8xf32> to vector<8xf32>
    %363 = vector.shape_cast %362 : vector<8xf32> to vector<8x1xf32>
    %364 = vector.broadcast %363 : vector<8x1xf32> to vector<8x8xf32>
    %365 = arith.divf %361, %364 : vector<8x8xf32>
    %366 = arith.truncf %365 : vector<8x8xf32> to vector<8x8xbf16>
    %cst_165 = arith.constant dense<0.000000e+00> : vector<8x16xf32>
    %367 = tpu.matmul %366, %353, %cst_165 {dimension_numbers = #tpu.dot_dimension_numbers<[1], [0], [0], [1], [0, 0, 1, 1], [], []>} : vector<8x8xbf16>, vector<8x16xbf16>, vector<8x16xf32> -> vector<8x16xf32>
    %368 = arith.truncf %367 : vector<8x16xf32> to vector<8x16xbf16>
    %cst_166 = arith.constant dense<0.000000e+00> : vector<8x32xf32>
    %369 = tpu.matmul %368, %312, %cst_166 {dimension_numbers = #tpu.dot_dimension_numbers<[1], [0], [0], [1], [0, 0, 1, 1], [], []>} : vector<8x16xbf16>, vector<16x32xbf16>, vector<8x32xf32> -> vector<8x32xf32>
    %370 = arith.addf %308, %369 : vector<8x32xf32>
    %c352 = arith.constant 352 : index
    %c0_167 = arith.constant 0 : index
    %371 = vector.load %arg3[%c352, %c0_167] : memref<640x64xbf16, #tpu.memory_space<vmem>>, vector<32x16xbf16>
    %c416 = arith.constant 416 : index
    %c0_168 = arith.constant 0 : index
    %372 = vector.load %arg3[%c416, %c0_168] : memref<640x64xbf16, #tpu.memory_space<vmem>>, vector<32x16xbf16>
    %c480 = arith.constant 480 : index
    %c0_169 = arith.constant 0 : index
    %373 = vector.load %arg3[%c480, %c0_169] : memref<640x64xbf16, #tpu.memory_space<vmem>>, vector<32x16xbf16>
    %c528 = arith.constant 528 : index
    %c0_170 = arith.constant 0 : index
    %374 = vector.load %arg3[%c528, %c0_170] : memref<640x64xbf16, #tpu.memory_space<vmem>>, vector<16x32xbf16>
    %cst_171 = arith.constant dense<0.000000e+00> : vector<16x16xf32>
    %375 = tpu.matmul %306, %371, %cst_171 {dimension_numbers = #tpu.dot_dimension_numbers<[1], [0], [0], [1], [0, 0, 1, 1], [], []>} : vector<16x32xbf16>, vector<32x16xbf16>, vector<16x16xf32> -> vector<16x16xf32>
    %c16 = arith.constant 16 : index
    %c0_172 = arith.constant 0 : index
    %376 = vector.load %arg4[%c16, %c0_172] : memref<28x64xf32, #tpu.memory_space<vmem>>, vector<1x16xf32>
    %377 = vector.broadcast %376 : vector<1x16xf32> to vector<16x16xf32>
    %378 = arith.addf %375, %377 : vector<16x16xf32>
    %cst_173 = arith.constant dense<0.000000e+00> : vector<16x16xf32>
    %379 = tpu.matmul %306, %372, %cst_173 {dimension_numbers = #tpu.dot_dimension_numbers<[1], [0], [0], [1], [0, 0, 1, 1], [], []>} : vector<16x32xbf16>, vector<32x16xbf16>, vector<16x16xf32> -> vector<16x16xf32>
    %c18 = arith.constant 18 : index
    %c0_174 = arith.constant 0 : index
    %380 = vector.load %arg4[%c18, %c0_174] : memref<28x64xf32, #tpu.memory_space<vmem>>, vector<1x16xf32>
    %381 = vector.broadcast %380 : vector<1x16xf32> to vector<16x16xf32>
    %382 = arith.addf %379, %381 : vector<16x16xf32>
    %cst_175 = arith.constant dense<0.000000e+00> : vector<16x16xf32>
    %383 = tpu.matmul %306, %373, %cst_175 {dimension_numbers = #tpu.dot_dimension_numbers<[1], [0], [0], [1], [0, 0, 1, 1], [], []>} : vector<16x32xbf16>, vector<32x16xbf16>, vector<16x16xf32> -> vector<16x16xf32>
    %c20 = arith.constant 20 : index
    %c0_176 = arith.constant 0 : index
    %384 = vector.load %arg4[%c20, %c0_176] : memref<28x64xf32, #tpu.memory_space<vmem>>, vector<1x16xf32>
    %385 = vector.broadcast %384 : vector<1x16xf32> to vector<16x16xf32>
    %386 = arith.addf %383, %385 : vector<16x16xf32>
    %387 = vector.extract_strided_slice %378 {offsets = [0, 0], sizes = [8, 16], strides = [1, 1]} : vector<16x16xf32> to vector<8x16xf32>
    %388 = arith.truncf %387 : vector<8x16xf32> to vector<8x16xbf16>
    %389 = vector.extract_strided_slice %382 {offsets = [0, 0], sizes = [8, 16], strides = [1, 1]} : vector<16x16xf32> to vector<8x16xf32>
    %390 = arith.truncf %389 : vector<8x16xf32> to vector<8x16xbf16>
    %391 = vector.extract_strided_slice %386 {offsets = [0, 0], sizes = [8, 16], strides = [1, 1]} : vector<16x16xf32> to vector<8x16xf32>
    %392 = arith.truncf %391 : vector<8x16xf32> to vector<8x16xbf16>
    %cst_177 = arith.constant dense<0.000000e+00> : vector<8x8xf32>
    %393 = tpu.matmul %388, %390, %cst_177 {dimension_numbers = #tpu.dot_dimension_numbers<[1], [1], [0], [0], [0, 0, 1, 0], [], []>} : vector<8x16xbf16>, vector<8x16xbf16>, vector<8x8xf32> -> vector<8x8xf32>
    %394 = vector.broadcast %98 : vector<1x8xf32> to vector<8x8xf32>
    %395 = arith.addf %393, %394 : vector<8x8xf32>
    %cst_178 = arith.constant dense<0xFF800000> : vector<8xf32>
    %396 = vector.multi_reduction <maximumf>, %395, %cst_178 [1] : vector<8x8xf32> to vector<8xf32>
    %397 = vector.shape_cast %396 : vector<8xf32> to vector<8x1xf32>
    %398 = vector.broadcast %397 : vector<8x1xf32> to vector<8x8xf32>
    %399 = arith.subf %395, %398 : vector<8x8xf32>
    %400 = math.exp %399 : vector<8x8xf32>
    %cst_179 = arith.constant dense<0.000000e+00> : vector<8xf32>
    %401 = vector.multi_reduction <add>, %400, %cst_179 [1] : vector<8x8xf32> to vector<8xf32>
    %402 = vector.shape_cast %401 : vector<8xf32> to vector<8x1xf32>
    %403 = vector.broadcast %402 : vector<8x1xf32> to vector<8x8xf32>
    %404 = arith.divf %400, %403 : vector<8x8xf32>
    %405 = arith.truncf %404 : vector<8x8xf32> to vector<8x8xbf16>
    %cst_180 = arith.constant dense<0.000000e+00> : vector<8x16xf32>
    %406 = tpu.matmul %405, %392, %cst_180 {dimension_numbers = #tpu.dot_dimension_numbers<[1], [0], [0], [1], [0, 0, 1, 1], [], []>} : vector<8x8xbf16>, vector<8x16xbf16>, vector<8x16xf32> -> vector<8x16xf32>
    %407 = arith.truncf %406 : vector<8x16xf32> to vector<8x16xbf16>
    %cst_181 = arith.constant dense<0.000000e+00> : vector<8x32xf32>
    %408 = tpu.matmul %407, %374, %cst_181 {dimension_numbers = #tpu.dot_dimension_numbers<[1], [0], [0], [1], [0, 0, 1, 1], [], []>} : vector<8x16xbf16>, vector<16x32xbf16>, vector<8x32xf32> -> vector<8x32xf32>
    %409 = arith.addf %347, %408 : vector<8x32xf32>
    %410 = vector.extract_strided_slice %378 {offsets = [8, 0], sizes = [8, 16], strides = [1, 1]} : vector<16x16xf32> to vector<8x16xf32>
    %411 = arith.truncf %410 : vector<8x16xf32> to vector<8x16xbf16>
    %412 = vector.extract_strided_slice %382 {offsets = [8, 0], sizes = [8, 16], strides = [1, 1]} : vector<16x16xf32> to vector<8x16xf32>
    %413 = arith.truncf %412 : vector<8x16xf32> to vector<8x16xbf16>
    %414 = vector.extract_strided_slice %386 {offsets = [8, 0], sizes = [8, 16], strides = [1, 1]} : vector<16x16xf32> to vector<8x16xf32>
    %415 = arith.truncf %414 : vector<8x16xf32> to vector<8x16xbf16>
    %cst_182 = arith.constant dense<0.000000e+00> : vector<8x8xf32>
    %416 = tpu.matmul %411, %413, %cst_182 {dimension_numbers = #tpu.dot_dimension_numbers<[1], [1], [0], [0], [0, 0, 1, 0], [], []>} : vector<8x16xbf16>, vector<8x16xbf16>, vector<8x8xf32> -> vector<8x8xf32>
    %417 = vector.broadcast %99 : vector<1x8xf32> to vector<8x8xf32>
    %418 = arith.addf %416, %417 : vector<8x8xf32>
    %cst_183 = arith.constant dense<0xFF800000> : vector<8xf32>
    %419 = vector.multi_reduction <maximumf>, %418, %cst_183 [1] : vector<8x8xf32> to vector<8xf32>
    %420 = vector.shape_cast %419 : vector<8xf32> to vector<8x1xf32>
    %421 = vector.broadcast %420 : vector<8x1xf32> to vector<8x8xf32>
    %422 = arith.subf %418, %421 : vector<8x8xf32>
    %423 = math.exp %422 : vector<8x8xf32>
    %cst_184 = arith.constant dense<0.000000e+00> : vector<8xf32>
    %424 = vector.multi_reduction <add>, %423, %cst_184 [1] : vector<8x8xf32> to vector<8xf32>
    %425 = vector.shape_cast %424 : vector<8xf32> to vector<8x1xf32>
    %426 = vector.broadcast %425 : vector<8x1xf32> to vector<8x8xf32>
    %427 = arith.divf %423, %426 : vector<8x8xf32>
    %428 = arith.truncf %427 : vector<8x8xf32> to vector<8x8xbf16>
    %cst_185 = arith.constant dense<0.000000e+00> : vector<8x16xf32>
    %429 = tpu.matmul %428, %415, %cst_185 {dimension_numbers = #tpu.dot_dimension_numbers<[1], [0], [0], [1], [0, 0, 1, 1], [], []>} : vector<8x8xbf16>, vector<8x16xbf16>, vector<8x16xf32> -> vector<8x16xf32>
    %430 = arith.truncf %429 : vector<8x16xf32> to vector<8x16xbf16>
    %cst_186 = arith.constant dense<0.000000e+00> : vector<8x32xf32>
    %431 = tpu.matmul %430, %374, %cst_186 {dimension_numbers = #tpu.dot_dimension_numbers<[1], [0], [0], [1], [0, 0, 1, 1], [], []>} : vector<8x16xbf16>, vector<16x32xbf16>, vector<8x32xf32> -> vector<8x32xf32>
    %432 = arith.addf %370, %431 : vector<8x32xf32>
    %433 = tpu.concatenate %409, %432 in 0 : vector<8x32xf32>, vector<8x32xf32> -> vector<16x32xf32>
    %c21 = arith.constant 21 : index
    %c0_187 = arith.constant 0 : index
    %434 = vector.load %arg4[%c21, %c0_187] : memref<28x64xf32, #tpu.memory_space<vmem>>, vector<1x32xf32>
    %435 = vector.broadcast %434 : vector<1x32xf32> to vector<16x32xf32>
    %436 = arith.addf %433, %435 : vector<16x32xf32>
    %437 = arith.addf %436, %305 : vector<16x32xf32>
    %cst_188 = arith.constant dense<0.000000e+00> : vector<16xf32>
    %438 = vector.multi_reduction <add>, %437, %cst_188 [1] : vector<16x32xf32> to vector<16xf32>
    %439 = vector.shape_cast %438 : vector<16xf32> to vector<16x1xf32>
    %cst_189 = arith.constant 3.200000e+01 : f32
    %440 = vector.broadcast %cst_189 : f32 to vector<16x1xf32>
    %441 = arith.divf %439, %440 : vector<16x1xf32>
    %442 = vector.broadcast %441 : vector<16x1xf32> to vector<16x32xf32>
    %443 = arith.subf %437, %442 : vector<16x32xf32>
    %444 = arith.mulf %443, %443 : vector<16x32xf32>
    %cst_190 = arith.constant dense<0.000000e+00> : vector<16xf32>
    %445 = vector.multi_reduction <add>, %444, %cst_190 [1] : vector<16x32xf32> to vector<16xf32>
    %446 = vector.shape_cast %445 : vector<16xf32> to vector<16x1xf32>
    %cst_191 = arith.constant 3.200000e+01 : f32
    %447 = vector.broadcast %cst_191 : f32 to vector<16x1xf32>
    %448 = arith.divf %446, %447 : vector<16x1xf32>
    %449 = vector.broadcast %441 : vector<16x1xf32> to vector<16x32xf32>
    %450 = arith.subf %437, %449 : vector<16x32xf32>
    %cst_192 = arith.constant 9.99999996E-13 : f32
    %451 = vector.broadcast %cst_192 : f32 to vector<16x1xf32>
    %452 = arith.addf %448, %451 : vector<16x1xf32>
    %453 = math.rsqrt %452 : vector<16x1xf32>
    %454 = vector.broadcast %453 : vector<16x1xf32> to vector<16x32xf32>
    %455 = arith.mulf %450, %454 : vector<16x32xf32>
    %c22 = arith.constant 22 : index
    %c0_193 = arith.constant 0 : index
    %456 = vector.load %arg4[%c22, %c0_193] : memref<28x64xf32, #tpu.memory_space<vmem>>, vector<1x32xf32>
    %457 = vector.broadcast %456 : vector<1x32xf32> to vector<16x32xf32>
    %458 = arith.mulf %455, %457 : vector<16x32xf32>
    %c23 = arith.constant 23 : index
    %c0_194 = arith.constant 0 : index
    %459 = vector.load %arg4[%c23, %c0_194] : memref<28x64xf32, #tpu.memory_space<vmem>>, vector<1x32xf32>
    %460 = vector.broadcast %459 : vector<1x32xf32> to vector<16x32xf32>
    %461 = arith.addf %458, %460 : vector<16x32xf32>
    %c544 = arith.constant 544 : index
    %c0_195 = arith.constant 0 : index
    %462 = vector.load %arg3[%c544, %c0_195] : memref<640x64xbf16, #tpu.memory_space<vmem>>, vector<32x64xbf16>
    %c576 = arith.constant 576 : index
    %c0_196 = arith.constant 0 : index
    %463 = vector.load %arg3[%c576, %c0_196] : memref<640x64xbf16, #tpu.memory_space<vmem>>, vector<64x32xbf16>
    %464 = arith.truncf %461 : vector<16x32xf32> to vector<16x32xbf16>
    %cst_197 = arith.constant dense<0.000000e+00> : vector<16x64xf32>
    %465 = tpu.matmul %464, %462, %cst_197 {dimension_numbers = #tpu.dot_dimension_numbers<[1], [0], [0], [1], [0, 0, 1, 1], [], []>} : vector<16x32xbf16>, vector<32x64xbf16>, vector<16x64xf32> -> vector<16x64xf32>
    %c24 = arith.constant 24 : index
    %c0_198 = arith.constant 0 : index
    %466 = vector.load %arg4[%c24, %c0_198] : memref<28x64xf32, #tpu.memory_space<vmem>>, vector<1x64xf32>
    %467 = vector.broadcast %466 : vector<1x64xf32> to vector<16x64xf32>
    %468 = arith.addf %465, %467 : vector<16x64xf32>
    %cst_199 = arith.constant 5.000000e-01 : f32
    %469 = vector.broadcast %cst_199 : f32 to vector<16x64xf32>
    %470 = arith.mulf %469, %468 : vector<16x64xf32>
    %cst_200 = arith.constant 4.471500e-02 : f32
    %471 = vector.broadcast %cst_200 : f32 to vector<16x64xf32>
    %472 = arith.mulf %471, %468 : vector<16x64xf32>
    %473 = arith.mulf %472, %468 : vector<16x64xf32>
    %474 = arith.mulf %473, %468 : vector<16x64xf32>
    %475 = arith.addf %468, %474 : vector<16x64xf32>
    %cst_201 = arith.constant 0.797884583 : f32
    %476 = vector.broadcast %cst_201 : f32 to vector<16x64xf32>
    %477 = arith.mulf %476, %475 : vector<16x64xf32>
    %478 = math.tanh %477 : vector<16x64xf32>
    %cst_202 = arith.constant 1.000000e+00 : f32
    %479 = vector.broadcast %cst_202 : f32 to vector<16x64xf32>
    %480 = arith.addf %479, %478 : vector<16x64xf32>
    %481 = arith.mulf %470, %480 : vector<16x64xf32>
    %482 = arith.truncf %481 : vector<16x64xf32> to vector<16x64xbf16>
    %cst_203 = arith.constant dense<0.000000e+00> : vector<16x32xf32>
    %483 = tpu.matmul %482, %463, %cst_203 {dimension_numbers = #tpu.dot_dimension_numbers<[1], [0], [0], [1], [0, 0, 1, 1], [], []>} : vector<16x64xbf16>, vector<64x32xbf16>, vector<16x32xf32> -> vector<16x32xf32>
    %c25 = arith.constant 25 : index
    %c0_204 = arith.constant 0 : index
    %484 = vector.load %arg4[%c25, %c0_204] : memref<28x64xf32, #tpu.memory_space<vmem>>, vector<1x32xf32>
    %485 = vector.broadcast %484 : vector<1x32xf32> to vector<16x32xf32>
    %486 = arith.addf %483, %485 : vector<16x32xf32>
    %487 = arith.addf %486, %461 : vector<16x32xf32>
    %cst_205 = arith.constant dense<0.000000e+00> : vector<16xf32>
    %488 = vector.multi_reduction <add>, %487, %cst_205 [1] : vector<16x32xf32> to vector<16xf32>
    %489 = vector.shape_cast %488 : vector<16xf32> to vector<16x1xf32>
    %cst_206 = arith.constant 3.200000e+01 : f32
    %490 = vector.broadcast %cst_206 : f32 to vector<16x1xf32>
    %491 = arith.divf %489, %490 : vector<16x1xf32>
    %492 = vector.broadcast %491 : vector<16x1xf32> to vector<16x32xf32>
    %493 = arith.subf %487, %492 : vector<16x32xf32>
    %494 = arith.mulf %493, %493 : vector<16x32xf32>
    %cst_207 = arith.constant dense<0.000000e+00> : vector<16xf32>
    %495 = vector.multi_reduction <add>, %494, %cst_207 [1] : vector<16x32xf32> to vector<16xf32>
    %496 = vector.shape_cast %495 : vector<16xf32> to vector<16x1xf32>
    %cst_208 = arith.constant 3.200000e+01 : f32
    %497 = vector.broadcast %cst_208 : f32 to vector<16x1xf32>
    %498 = arith.divf %496, %497 : vector<16x1xf32>
    %499 = vector.broadcast %491 : vector<16x1xf32> to vector<16x32xf32>
    %500 = arith.subf %487, %499 : vector<16x32xf32>
    %cst_209 = arith.constant 9.99999996E-13 : f32
    %501 = vector.broadcast %cst_209 : f32 to vector<16x1xf32>
    %502 = arith.addf %498, %501 : vector<16x1xf32>
    %503 = math.rsqrt %502 : vector<16x1xf32>
    %504 = vector.broadcast %503 : vector<16x1xf32> to vector<16x32xf32>
    %505 = arith.mulf %500, %504 : vector<16x32xf32>
    %c26 = arith.constant 26 : index
    %c0_210 = arith.constant 0 : index
    %506 = vector.load %arg4[%c26, %c0_210] : memref<28x64xf32, #tpu.memory_space<vmem>>, vector<1x32xf32>
    %507 = vector.broadcast %506 : vector<1x32xf32> to vector<16x32xf32>
    %508 = arith.mulf %505, %507 : vector<16x32xf32>
    %c27 = arith.constant 27 : index
    %c0_211 = arith.constant 0 : index
    %509 = vector.load %arg4[%c27, %c0_211] : memref<28x64xf32, #tpu.memory_space<vmem>>, vector<1x32xf32>
    %510 = vector.broadcast %509 : vector<1x32xf32> to vector<16x32xf32>
    %511 = arith.addf %508, %510 : vector<16x32xf32>
    %c0_212 = arith.constant 0 : index
    %c0_213 = arith.constant 0 : index
    %512 = vector.load %arg5[%c0_212, %c0_213] : memref<16x32xf32, #tpu.memory_space<vmem>>, vector<16x32xf32>
    tpu.vector_store %arg5[%c0_212, %c0_213], %511 {strides = array<i32>} : memref<16x32xf32, #tpu.memory_space<vmem>>, vector<16x32xf32>,
    return
  }
}

</mosaic_0001>

<llo_original>
// kernel: bert_text_processor.1
$region0: #{bert_text_processor.1}
  #allocation0 [shape = 'u32[]', space=smem, size = 0x4, offset = 0x4, fixed_abs, tag = 'smem constant byte address 0x4 - core index']
  #allocation1 [shape = 'u32[72,128]{1,0:T(1,128)}', space=vmem, size = 0x9000, scoped, tag = 'internal scratch']
  #allocation2 [shape = 'f32[16,32]{1,0:T(8,128)}', space=vmem, size = 0x2000, scoped, tag = 'scratch operand']
  #allocation3 [shape = 's32[1]{0}', space=sflag, size = 0x4, scoped, tag = 'scoped memory for bert_text_processor.1']
  #allocation4 [shape = 'u8[512]{0}', space=smem, size = 0x200, scoped, tag = 'prefetched SMEM operand 0']
  %s0 = inlined_call_operand.vmem [shape: s32[16], index: 0, kind: input, shape index: {}]
  %s1 = inlined_call_operand.vmem [shape: s32[2,8], index: 1, kind: input, shape index: {}]
  %s2 = inlined_call_operand.vmem [shape: f32[116,32], index: 2, kind: input, shape index: {}]
  %s3 = inlined_call_operand.vmem [shape: bf16[640,64], index: 3, kind: input, shape index: {}]
  %s4 = inlined_call_operand.vmem [shape: f32[28,64], index: 4, kind: input, shape index: {}]
  %s5 = inlined_call_operand.hbm [shape: f32[16,32], index: 5, kind: output, shape index: {}]
  %s6 = sld [smem:[#allocation0]]
  $region26: #{bert_text_processor.1} parent=0
    _
  %s8 = ssub.s32 1, %s6
  %s9 = scalar_select 0, %s8, %s6
  %s11 = sshll.u32 %s0, 4
  %s12 = int_to_ptr.vmem [resolvable:$true] %s11
  %14 = dma.vmem_to_smem %s12, 16, [#allocation4], [#allocation3]
  %16 = dma.done [#allocation3], 16
  %17 = sfence
  $region1: #{bert_text_processor.1} parent=0
    #allocation5 [shape = 'u8[8192]{0}', space=vmem, size = 0x2000, scoped, tag = 'output window, operand 0, single buffered']
    #allocation6 [shape = 's32[1]{0}', space=sflag, size = 0x4, scoped, tag = 'scoped memory for bert_text_processor.1']
    %18 = vsyncpa [#allocation6], 0
    // Predicated region
    $region2: #{bert_text_processor.1} parent=1 // pred_check
      _
    $region3: #{bert_text_processor.1} parent=1 // pred_check_branch
      %20 = sbr.rel (0) target = $region5
    $region4: #{bert_text_processor.1} parent=1 // pred_region
      _
    $region5: #{bert_text_processor.1} parent=1 // pred_fallthru
      _
    // Predicated region
    $region6: #{bert_text_processor.1} parent=1 // pred_check
      _
    $region7: #{bert_text_processor.1} parent=1 // pred_check_branch
      %22 = sbr.rel (0) target = $region9
    $region8: #{bert_text_processor.1} parent=1 // pred_region
      _
    $region9: #{bert_text_processor.1} parent=1 // pred_fallthru
      _
    // Predicated region
    $region10: #{bert_text_processor.1} parent=1 // pred_check
      _
    $region11: #{bert_text_processor.1} parent=1 // pred_check_branch
      %24 = sbr.rel (0) target = $region13
    $region12: #{bert_text_processor.1} parent=1 // pred_region
      _
    $region13: #{bert_text_processor.1} parent=1 // pred_fallthru
      _
    // Predicated region
    $region14: #{bert_text_processor.1} parent=1 // pred_check
      _
    $region15: #{bert_text_processor.1} parent=1 // pred_check_branch
      %26 = sbr.rel (0) target = $region17
    $region16: #{bert_text_processor.1} parent=1 // pred_region
      _
    $region17: #{bert_text_processor.1} parent=1 // pred_fallthru
      _
    %s28 = sld [smem:[#allocation4]]
    %s29 = scalar_lea.vmem %s2, %s28
    %v30 = vld [vmem:[%s29] sm:$0x1]
    %vm31 = vcmask 253952
    %32 = vst.msk [vmem:[#allocation2] sm:$0x1] %vm31, %v30
    %s33 = sld [smem:[#allocation4 + $0x1]]
    %s34 = scalar_lea.vmem %s2, %s33
    %v35 = vld [vmem:[%s34] sm:$0x1]
    %36 = vst.msk [vmem:[#allocation2 + $0x1] sm:$0x1] %vm31, %v35
    %s37 = sld [smem:[#allocation4 + $0x2]]
    %s38 = scalar_lea.vmem %s2, %s37
    %v39 = vld [vmem:[%s38] sm:$0x1]
    %40 = vst.msk [vmem:[#allocation2 + $0x2] sm:$0x1] %vm31, %v39
    %s41 = sld [smem:[#allocation4 + $0x3]]
    %s42 = scalar_lea.vmem %s2, %s41
    %v43 = vld [vmem:[%s42] sm:$0x1]
    %44 = vst.msk [vmem:[#allocation2 + $0x3] sm:$0x1] %vm31, %v43
    %s45 = sld [smem:[#allocation4 + $0x4]]
    %s46 = scalar_lea.vmem %s2, %s45
    %v47 = vld [vmem:[%s46] sm:$0x1]
    %48 = vst.msk [vmem:[#allocation2 + $0x4] sm:$0x1] %vm31, %v47
    %s49 = sld [smem:[#allocation4 + $0x5]]
    %s50 = scalar_lea.vmem %s2, %s49
    %v51 = vld [vmem:[%s50] sm:$0x1]
    %52 = vst.msk [vmem:[#allocation2 + $0x5] sm:$0x1] %vm31, %v51
    %s53 = sld [smem:[#allocation4 + $0x6]]
    %s54 = scalar_lea.vmem %s2, %s53
    %v55 = vld [vmem:[%s54] sm:$0x1]
    %56 = vst.msk [vmem:[#allocation2 + $0x6] sm:$0x1] %vm31, %v55
    %s57 = sld [smem:[#allocation4 + $0x7]]
    %s58 = scalar_lea.vmem %s2, %s57
    %v59 = vld [vmem:[%s58] sm:$0x1]
    %60 = vst.msk [vmem:[#allocation2 + $0x7] sm:$0x1] %vm31, %v59
    %s61 = sld [smem:[#allocation4 + $0x8]]
    %s62 = scalar_lea.vmem %s2, %s61
    %v63 = vld [vmem:[%s62] sm:$0x1]
    %64 = vst.msk [vmem:[#allocation2 + $0x8] sm:$0x1] %vm31, %v63
    %s65 = sld [smem:[#allocation4 + $0x9]]
    %s66 = scalar_lea.vmem %s2, %s65
    %v67 = vld [vmem:[%s66] sm:$0x1]
    %68 = vst.msk [vmem:[#allocation2 + $0x9] sm:$0x1] %vm31, %v67
    %s69 = sld [smem:[#allocation4 + $0xa]]
    %s70 = scalar_lea.vmem %s2, %s69
    %v71 = vld [vmem:[%s70] sm:$0x1]
    %72 = vst.msk [vmem:[#allocation2 + $0xa] sm:$0x1] %vm31, %v71
    %s73 = sld [smem:[#allocation4 + $0xb]]
    %s74 = scalar_lea.vmem %s2, %s73
    %v75 = vld [vmem:[%s74] sm:$0x1]
    %76 = vst.msk [vmem:[#allocation2 + $0xb] sm:$0x1] %vm31, %v75
    %s77 = sld [smem:[#allocation4 + $0xc]]
    %s78 = scalar_lea.vmem %s2, %s77
    %v79 = vld [vmem:[%s78] sm:$0x1]
    %80 = vst.msk [vmem:[#allocation2 + $0xc] sm:$0x1] %vm31, %v79
    %s81 = sld [smem:[#allocation4 + $0xd]]
    %s82 = scalar_lea.vmem %s2, %s81
    %v83 = vld [vmem:[%s82] sm:$0x1]
    %84 = vst.msk [vmem:[#allocation2 + $0xd] sm:$0x1] %vm31, %v83
    %s85 = sld [smem:[#allocation4 + $0xe]]
    %s86 = scalar_lea.vmem %s2, %s85
    %v87 = vld [vmem:[%s86] sm:$0x1]
    %88 = vst.msk [vmem:[#allocation2 + $0xe] sm:$0x1] %vm31, %v87
    %s89 = sld [smem:[#allocation4 + $0xf]]
    %s90 = scalar_lea.vmem %s2, %s89
    %v91 = vld [vmem:[%s90] sm:$0x1]
    %92 = vst.msk [vmem:[#allocation2 + $0xf] sm:$0x1] %vm31, %v91
    %v93 = vld [vmem:[%s2 + $0x64] sm:$0xff]
    %v94 = vld [vmem:[#allocation2] sm:$0xff]
    %v95 = vld [vmem:[#allocation2 + $0x8] sm:$0xff]
    %v96 = vadd.f32 %v94, %v93
    %v97 = vadd.f32 %v95, %v93
    %vm98 = vcmask 261120
    %v99 = vsel %vm98, %v96, 0.0
    %100 = vadd.xlane.f32.xlu0 %v99
    %v101 = vpop.xlane.xlu0 %100
    %v102 = vsel %vm98, %v97, 0.0
    %103 = vadd.xlane.f32.xlu0 %v102
    %v104 = vpop.xlane.xlu0 %103
    %v105 = vrcp.pop 32.0
    %v106 = vmul.f32 32.0, %v105
    %v107 = vsub.f32 1.0, %v106
    %v108 = vmul.f32 %v105, %v107
    %v109 = vadd.f32 %v105, %v108
    %vm110 = vweird.f32 %v105
    %v111 = vsel %vm110, %v105, %v109
    %v112 = vmul.f32 %v101, %v111
    %v113 = vmul.f32 %v104, %v111
    %v114 = vsub.f32 %v96, %v112
    %v115 = vsub.f32 %v97, %v113
    %v116 = vmul.f32 %v114, %v114
    %v117 = vmul.f32 %v115, %v115
    %v118 = vsel %vm98, %v116, 0.0
    %119 = vadd.xlane.f32.xlu0 %v118
    %v120 = vpop.xlane.xlu0 %119
    %v121 = vsel %vm98, %v117, 0.0
    %122 = vadd.xlane.f32.xlu0 %v121
    %v123 = vpop.xlane.xlu0 %122
    %v124 = vmul.f32 %v120, %v111
    %v125 = vmul.f32 %v123, %v111
    %v126 = vadd.f32 %v124, 1e-12
    %v127 = vadd.f32 %v125, 1e-12
    %v128 = vrsqrt.pop %v126
    %v129 = vmul.f32 %v128, %v126
    %v130 = vmul.f32 %v129, %v128
    %v131 = vmul.f32 0.5, %v130
    %v132 = vsub.f32 1.5, %v131
    %v133 = vmul.f32 %v128, %v132
    %vm134 = vweird.f32 %v126
    %vm135 = vweird.f32 %v128
    %vm136 = vmor %vm134, %vm135
    %v137 = vsel %vm136, %v128, %v133
    %v138 = vrsqrt.pop %v127
    %v139 = vmul.f32 %v138, %v127
    %v140 = vmul.f32 %v139, %v138
    %v141 = vmul.f32 0.5, %v140
    %v142 = vsub.f32 1.5, %v141
    %v143 = vmul.f32 %v138, %v142
    %vm144 = vweird.f32 %v127
    %vm145 = vweird.f32 %v138
    %vm146 = vmor %vm144, %vm145
    %v147 = vsel %vm146, %v138, %v143
    %v148 = vmul.f32 %v114, %v137
    %v149 = vmul.f32 %v115, %v147
    %v150 = vld [vmem:[%s4] sm:$0x1]
    %v151 = vperm.slane %v150, 0
    %v152 = vmul.f32 %v148, %v151
    %v153 = vmul.f32 %v149, %v151
    %v154 = vld [vmem:[%s4 + $0x1] sm:$0x1]
    %v155 = vperm.slane %v154, 0
    %v156 = vadd.f32 %v152, %v155
    %v157 = vadd.f32 %v153, %v155
    %v158 = vld [vmem:[%s1] sm:$0x3]
    %v159 = vcvt.s32.f32 %v158
    %v160 = vsub.f32 1.0, %v159
    %v161 = vmul.f32 %v160, -10000.0
    %v162 = vpack.c.bf16 %v157, %v156
    %v163 = vld [vmem:[%s3] sm:$0xf]
    %v164 = vld [vmem:[%s3 + $0x4] sm:$0xf]
    %v165 = vld [vmem:[%s3 + $0x8] sm:$0xf]
    %v166 = vld [vmem:[%s3 + $0xc] sm:$0xf]
    %v167 = vld [vmem:[%s3 + $0x20] sm:$0xf]
    %v168 = vld [vmem:[%s3 + $0x24] sm:$0xf]
    %v169 = vld [vmem:[%s3 + $0x28] sm:$0xf]
    %v170 = vld [vmem:[%s3 + $0x2c] sm:$0xf]
    %v171 = vld [vmem:[%s3 + $0x40] sm:$0xf]
    %v172 = vld [vmem:[%s3 + $0x44] sm:$0xf]
    %v173 = vld [vmem:[%s3 + $0x48] sm:$0xf]
    %v174 = vld [vmem:[%s3 + $0x4c] sm:$0xf]
    %v175 = vld [vmem:[%s3 + $0x60] sm:$0xf]
    %v176 = vld [vmem:[%s3 + $0x64] sm:$0xf]
    %v177 = vld [vmem:[%s4 + $0x2] sm:$0x1]
    %v178 = vperm.slane %v177, 0
    %v183 = vunpack.c.l.b16 %v163
    %v184 = vunpack.c.l.b16 %v164
    %v185 = vunpack.c.l.b16 %v165
    %v186 = vunpack.c.l.b16 %v166
    %v187 = vpack.c.b16 %v184, %v183
    %v188 = vpack.c.b16 %v186, %v185
    %v192 = vsel %vm98, %v162, 0
    %194 = vmatpush.bf16.msra.mxu0 0
    %195 = vmatpush.bf16.msra.mxu0 0
    %196 = vmatpush.bf16.msra.mxu0 0
    %197 = vmatpush.bf16.msra.mxu0 0
    %198 = vmatpush.bf16.msra.mxu0 0
    %199 = vmatpush.bf16.msra.mxu0 0
    %200 = vmatpush.bf16.msra.mxu0 %v188
    %201 = vmatpush.bf16.msra.mxu0 %v187
    %202 = vmatmul.bf16.gmra.mxu0 %v192
    %v203 = vpop.f32.mrf.mxu0
    %v204 = vadd.f32 %v178, %v203
    %v205 = vpop.f32.mrf.mxu0
    %v206 = vadd.f32 %v178, %v205
    %207 = vdwg.mxu0
    %v208 = vld [vmem:[%s4 + $0x4] sm:$0x1]
    %v209 = vperm.slane %v208, 0
    %v214 = vunpack.c.l.b16 %v167
    %v215 = vunpack.c.l.b16 %v168
    %v216 = vunpack.c.l.b16 %v169
    %v217 = vunpack.c.l.b16 %v170
    %v218 = vpack.c.b16 %v215, %v214
    %v219 = vpack.c.b16 %v217, %v216
    %222 = vmatpush.bf16.msra.mxu0 0
    %223 = vmatpush.bf16.msra.mxu0 0
    %224 = vmatpush.bf16.msra.mxu0 0
    %225 = vmatpush.bf16.msra.mxu0 0
    %226 = vmatpush.bf16.msra.mxu0 0
    %227 = vmatpush.bf16.msra.mxu0 0
    %228 = vmatpush.bf16.msra.mxu0 %v219
    %229 = vmatpush.bf16.msra.mxu0 %v218
    %230 = vmatmul.bf16.gmra.mxu0 %v192
    %v231 = vpop.f32.mrf.mxu0
    %v232 = vadd.f32 %v209, %v231
    %v233 = vpop.f32.mrf.mxu0
    %v234 = vadd.f32 %v209, %v233
    %235 = vdwg.mxu0
    %v236 = vld [vmem:[%s4 + $0x6] sm:$0x1]
    %v237 = vperm.slane %v236, 0
    %v242 = vunpack.c.l.b16 %v171
    %v243 = vunpack.c.l.b16 %v172
    %v244 = vunpack.c.l.b16 %v173
    %v245 = vunpack.c.l.b16 %v174
    %v246 = vpack.c.b16 %v243, %v242
    %v247 = vpack.c.b16 %v245, %v244
    %250 = vmatpush.bf16.msra.mxu0 0
    %251 = vmatpush.bf16.msra.mxu0 0
    %252 = vmatpush.bf16.msra.mxu0 0
    %253 = vmatpush.bf16.msra.mxu0 0
    %254 = vmatpush.bf16.msra.mxu0 0
    %255 = vmatpush.bf16.msra.mxu0 0
    %256 = vmatpush.bf16.msra.mxu0 %v247
    %257 = vmatpush.bf16.msra.mxu0 %v246
    %258 = vmatmul.bf16.gmra.mxu0 %v192
    %v259 = vpop.f32.mrf.mxu0
    %v260 = vadd.f32 %v237, %v259
    %v261 = vpop.f32.mrf.mxu0
    %v262 = vadd.f32 %v237, %v261
    %263 = vdwg.mxu0
    %v264 = vpack.c.bf16 %v204, %v204
    %v265 = vpack.c.bf16 %v232, %v232
    %v266 = vpack.c.bf16 %v260, %v260
    %v267 = vperm.slane %v161, 0
    %vm268 = vcmask 130048
    %v270 = vsel %vm268, %v264, 0
    %v273 = vsel %vm268, %v265, 0
    %275 = vmatpush.bf16.xpose.msra.mxu0 0
    %276 = vmatpush.bf16.xpose.msra.mxu0 0
    %277 = vmatpush.bf16.xpose.msra.mxu0 0
    %278 = vmatpush.bf16.xpose.msra.mxu0 0
    %279 = vmatpush.bf16.xpose.msra.mxu0 0
    %280 = vmatpush.bf16.xpose.msra.mxu0 0
    %281 = vmatpush.bf16.xpose.msra.mxu0 0
    %282 = vmatpush.bf16.xpose.msra.mxu0 %v273
    %283 = vmatmul.bf16.gmra.mxu0 %v270
    %v284 = vpop.f32.mrf.mxu0
    %v285 = vadd.f32 %v267, %v284
    %v286 = vpop.f32.mrf.mxu0
    %287 = vdwg.mxu0
    %vm288 = vcmask 64512
    %v289 = vsel %vm288, %v285, -inf
    %290 = vmax.xlane.f32.xlu0 %v289
    %v291 = vpop.xlane.xlu0 %290
    %v292 = vsub.f32 %v285, %v291
    %v293 = vmul.f32 %v292, 1.442695
    %v294 = vpow.pop %v293
    %v295 = vsel %vm288, %v294, 0.0
    %296 = vadd.xlane.f32.xlu0 %v295
    %v297 = vpop.xlane.xlu0 %296
    %v298 = vrcp.pop %v297
    %v299 = vmul.f32 %v297, %v298
    %v300 = vsub.f32 1.0, %v299
    %v301 = vmul.f32 %v298, %v300
    %v302 = vadd.f32 %v298, %v301
    %vm303 = vweird.f32 %v297
    %vm304 = vweird.f32 %v298
    %vm305 = vmor %vm303, %vm304
    %v306 = vsel %vm305, %v298, %v302
    %v307 = vand.u32 2147483647, %v297
    %vm308 = vcmp.eq.f32.partialorder %v307, 8.507059e+37
    %v309 = vand.u32 %v297, 2147483648
    %v310 = vor.u32 1.1754944e-38, %v309
    %v311 = vsel %vm308, %v310, %v306
    %v312 = vmul.f32 %v294, %v311
    %v313 = vpack.c.bf16 %v312, %v312
    %v315 = vsel %vm288, %v313, 0
    %vm317 = vcmask 1043456
    %v319 = vsel %vm317, %v266, 0
    %321 = vmatpush.bf16.msra.mxu0 0
    %322 = vmatpush.bf16.msra.mxu0 0
    %323 = vmatpush.bf16.msra.mxu0 0
    %324 = vmatpush.bf16.msra.mxu0 0
    %325 = vmatpush.bf16.msra.mxu0 0
    %326 = vmatpush.bf16.msra.mxu0 0
    %327 = vmatpush.bf16.msra.mxu0 0
    %328 = vmatpush.bf16.msra.mxu0 %v319
    %329 = vmatmul.bf16.gmra.mxu0 %v315
    %v330 = vpop.f32.mrf.mxu0
    %v331 = vadd.f32 0.0, %v330
    %v332 = vpop.f32.mrf.mxu0
    %333 = vdwg.mxu0
    %v334 = vpack.c.bf16 %v331, %v331
    %v335 = vpack.c.bf16 %v206, %v206
    %v336 = vpack.c.bf16 %v234, %v234
    %v337 = vpack.c.bf16 %v262, %v262
    %v338 = vperm.slane %v161, 1
    %v340 = vsel %vm268, %v335, 0
    %v343 = vsel %vm268, %v336, 0
    %345 = vmatpush.bf16.xpose.msra.mxu0 0
    %346 = vmatpush.bf16.xpose.msra.mxu0 0
    %347 = vmatpush.bf16.xpose.msra.mxu0 0
    %348 = vmatpush.bf16.xpose.msra.mxu0 0
    %349 = vmatpush.bf16.xpose.msra.mxu0 0
    %350 = vmatpush.bf16.xpose.msra.mxu0 0
    %351 = vmatpush.bf16.xpose.msra.mxu0 0
    %352 = vmatpush.bf16.xpose.msra.mxu0 %v343
    %353 = vmatmul.bf16.gmra.mxu0 %v340
    %v354 = vpop.f32.mrf.mxu0
    %v355 = vadd.f32 %v338, %v354
    %v356 = vpop.f32.mrf.mxu0
    %357 = vdwg.mxu0
    %v358 = vsel %vm288, %v355, -inf
    %359 = vmax.xlane.f32.xlu0 %v358
    %v360 = vpop.xlane.xlu0 %359
    %v361 = vsub.f32 %v355, %v360
    %v362 = vmul.f32 %v361, 1.442695
    %v363 = vpow.pop %v362
    %v364 = vsel %vm288, %v363, 0.0
    %365 = vadd.xlane.f32.xlu0 %v364
    %v366 = vpop.xlane.xlu0 %365
    %v367 = vrcp.pop %v366
    %v368 = vmul.f32 %v366, %v367
    %v369 = vsub.f32 1.0, %v368
    %v370 = vmul.f32 %v367, %v369
    %v371 = vadd.f32 %v367, %v370
    %vm372 = vweird.f32 %v366
    %vm373 = vweird.f32 %v367
    %vm374 = vmor %vm372, %vm373
    %v375 = vsel %vm374, %v367, %v371
    %v376 = vand.u32 2147483647, %v366
    %vm377 = vcmp.eq.f32.partialorder %v376, 8.507059e+37
    %v378 = vand.u32 %v366, 2147483648
    %v379 = vor.u32 1.1754944e-38, %v378
    %v380 = vsel %vm377, %v379, %v375
    %v381 = vmul.f32 %v363, %v380
    %v382 = vpack.c.bf16 %v381, %v381
    %v384 = vsel %vm288, %v382, 0
    %v387 = vsel %vm317, %v337, 0
    %389 = vmatpush.bf16.msra.mxu0 0
    %390 = vmatpush.bf16.msra.mxu0 0
    %391 = vmatpush.bf16.msra.mxu0 0
    %392 = vmatpush.bf16.msra.mxu0 0
    %393 = vmatpush.bf16.msra.mxu0 0
    %394 = vmatpush.bf16.msra.mxu0 0
    %395 = vmatpush.bf16.msra.mxu0 0
    %396 = vmatpush.bf16.msra.mxu0 %v387
    %397 = vmatmul.bf16.gmra.mxu0 %v384
    %v398 = vpop.f32.mrf.mxu0
    %v399 = vadd.f32 0.0, %v398
    %v400 = vpop.f32.mrf.mxu0
    %401 = vdwg.mxu0
    %v402 = vpack.c.bf16 %v399, %v399
    %v403 = vld [vmem:[%s3 + $0x10] sm:$0xf]
    %v404 = vld [vmem:[%s3 + $0x14] sm:$0xf]
    %v405 = vld [vmem:[%s3 + $0x18] sm:$0xf]
    %v406 = vld [vmem:[%s3 + $0x1c] sm:$0xf]
    %v407 = vld [vmem:[%s3 + $0x30] sm:$0xf]
    %v408 = vld [vmem:[%s3 + $0x34] sm:$0xf]
    %v409 = vld [vmem:[%s3 + $0x38] sm:$0xf]
    %v410 = vld [vmem:[%s3 + $0x3c] sm:$0xf]
    %v411 = vld [vmem:[%s3 + $0x50] sm:$0xf]
    %v412 = vld [vmem:[%s3 + $0x54] sm:$0xf]
    %v413 = vld [vmem:[%s3 + $0x58] sm:$0xf]
    %v414 = vld [vmem:[%s3 + $0x5c] sm:$0xf]
    %v415 = vld [vmem:[%s3 + $0x68] sm:$0xf]
    %v416 = vld [vmem:[%s3 + $0x6c] sm:$0xf]
    %v417 = vld [vmem:[%s4 + $0x3] sm:$0x1]
    %v418 = vperm.slane %v417, 0
    %v423 = vunpack.c.l.b16 %v403
    %v424 = vunpack.c.l.b16 %v404
    %v425 = vunpack.c.l.b16 %v405
    %v426 = vunpack.c.l.b16 %v406
    %v427 = vpack.c.b16 %v424, %v423
    %v428 = vpack.c.b16 %v426, %v425
    %431 = vmatpush.bf16.msra.mxu0 0
    %432 = vmatpush.bf16.msra.mxu0 0
    %433 = vmatpush.bf16.msra.mxu0 0
    %434 = vmatpush.bf16.msra.mxu0 0
    %435 = vmatpush.bf16.msra.mxu0 0
    %436 = vmatpush.bf16.msra.mxu0 0
    %437 = vmatpush.bf16.msra.mxu0 %v428
    %438 = vmatpush.bf16.msra.mxu0 %v427
    %439 = vmatmul.bf16.gmra.mxu0 %v192
    %v440 = vpop.f32.mrf.mxu0
    %v441 = vadd.f32 %v418, %v440
    %v442 = vpop.f32.mrf.mxu0
    %v443 = vadd.f32 %v418, %v442
    %444 = vdwg.mxu0
    %v445 = vld [vmem:[%s4 + $0x5] sm:$0x1]
    %v446 = vperm.slane %v445, 0
    %v451 = vunpack.c.l.b16 %v407
    %v452 = vunpack.c.l.b16 %v408
    %v453 = vunpack.c.l.b16 %v409
    %v454 = vunpack.c.l.b16 %v410
    %v455 = vpack.c.b16 %v452, %v451
    %v456 = vpack.c.b16 %v454, %v453
    %459 = vmatpush.bf16.msra.mxu0 0
    %460 = vmatpush.bf16.msra.mxu0 0
    %461 = vmatpush.bf16.msra.mxu0 0
    %462 = vmatpush.bf16.msra.mxu0 0
    %463 = vmatpush.bf16.msra.mxu0 0
    %464 = vmatpush.bf16.msra.mxu0 0
    %465 = vmatpush.bf16.msra.mxu0 %v456
    %466 = vmatpush.bf16.msra.mxu0 %v455
    %467 = vmatmul.bf16.gmra.mxu0 %v192
    %v468 = vpop.f32.mrf.mxu0
    %v469 = vadd.f32 %v446, %v468
    %v470 = vpop.f32.mrf.mxu0
    %v471 = vadd.f32 %v446, %v470
    %472 = vdwg.mxu0
    %v473 = vld [vmem:[%s4 + $0x7] sm:$0x1]
    %v474 = vperm.slane %v473, 0
    %v479 = vunpack.c.l.b16 %v411
    %v480 = vunpack.c.l.b16 %v412
    %v481 = vunpack.c.l.b16 %v413
    %v482 = vunpack.c.l.b16 %v414
    %v483 = vpack.c.b16 %v480, %v479
    %v484 = vpack.c.b16 %v482, %v481
    %487 = vmatpush.bf16.msra.mxu0 0
    %488 = vmatpush.bf16.msra.mxu0 0
    %489 = vmatpush.bf16.msra.mxu0 0
    %490 = vmatpush.bf16.msra.mxu0 0
    %491 = vmatpush.bf16.msra.mxu0 0
    %492 = vmatpush.bf16.msra.mxu0 0
    %493 = vmatpush.bf16.msra.mxu0 %v484
    %494 = vmatpush.bf16.msra.mxu0 %v483
    %495 = vmatmul.bf16.gmra.mxu0 %v192
    %v496 = vpop.f32.mrf.mxu0
    %v497 = vadd.f32 %v474, %v496
    %v498 = vpop.f32.mrf.mxu0
    %v499 = vadd.f32 %v474, %v498
    %500 = vdwg.mxu0
    %v501 = vpack.c.bf16 %v441, %v441
    %v502 = vpack.c.bf16 %v469, %v469
    %v503 = vpack.c.bf16 %v497, %v497
    %v505 = vsel %vm268, %v501, 0
    %v508 = vsel %vm268, %v502, 0
    %510 = vmatpush.bf16.xpose.msra.mxu0 0
    %511 = vmatpush.bf16.xpose.msra.mxu0 0
    %512 = vmatpush.bf16.xpose.msra.mxu0 0
    %513 = vmatpush.bf16.xpose.msra.mxu0 0
    %514 = vmatpush.bf16.xpose.msra.mxu0 0
    %515 = vmatpush.bf16.xpose.msra.mxu0 0
    %516 = vmatpush.bf16.xpose.msra.mxu0 0
    %517 = vmatpush.bf16.xpose.msra.mxu0 %v508
    %518 = vmatmul.bf16.gmra.mxu0 %v505
    %v519 = vpop.f32.mrf.mxu0
    %v520 = vadd.f32 %v267, %v519
    %v521 = vpop.f32.mrf.mxu0
    %522 = vdwg.mxu0
    %v523 = vsel %vm288, %v520, -inf
    %524 = vmax.xlane.f32.xlu0 %v523
    %v525 = vpop.xlane.xlu0 %524
    %v526 = vsub.f32 %v520, %v525
    %v527 = vmul.f32 %v526, 1.442695
    %v528 = vpow.pop %v527
    %v529 = vsel %vm288, %v528, 0.0
    %530 = vadd.xlane.f32.xlu0 %v529
    %v531 = vpop.xlane.xlu0 %530
    %v532 = vrcp.pop %v531
    %v533 = vmul.f32 %v531, %v532
    %v534 = vsub.f32 1.0, %v533
    %v535 = vmul.f32 %v532, %v534
    %v536 = vadd.f32 %v532, %v535
    %vm537 = vweird.f32 %v531
    %vm538 = vweird.f32 %v532
    %vm539 = vmor %vm537, %vm538
    %v540 = vsel %vm539, %v532, %v536
    %v541 = vand.u32 2147483647, %v531
    %vm542 = vcmp.eq.f32.partialorder %v541, 8.507059e+37
    %v543 = vand.u32 %v531, 2147483648
    %v544 = vor.u32 1.1754944e-38, %v543
    %v545 = vsel %vm542, %v544, %v540
    %v546 = vmul.f32 %v528, %v545
    %v547 = vpack.c.bf16 %v546, %v546
    %v549 = vsel %vm288, %v547, 0
    %v552 = vsel %vm317, %v503, 0
    %554 = vmatpush.bf16.msra.mxu0 0
    %555 = vmatpush.bf16.msra.mxu0 0
    %556 = vmatpush.bf16.msra.mxu0 0
    %557 = vmatpush.bf16.msra.mxu0 0
    %558 = vmatpush.bf16.msra.mxu0 0
    %559 = vmatpush.bf16.msra.mxu0 0
    %560 = vmatpush.bf16.msra.mxu0 0
    %561 = vmatpush.bf16.msra.mxu0 %v552
    %562 = vmatmul.bf16.gmra.mxu0 %v549
    %v563 = vpop.f32.mrf.mxu0
    %v564 = vadd.f32 0.0, %v563
    %v565 = vpop.f32.mrf.mxu0
    %566 = vdwg.mxu0
    %v567 = vpack.c.bf16 %v564, %v564
    %v570 = vunpack.c.l.b16 %v415
    %v571 = vunpack.c.l.b16 %v416
    %v572 = vpack.c.b16 %v571, %v570
    %v575 = vsel %vm268, %v567, 0
    %577 = vmatpush.bf16.msra.mxu0 0
    %578 = vmatpush.bf16.msra.mxu0 0
    %579 = vmatpush.bf16.msra.mxu0 0
    %580 = vmatpush.bf16.msra.mxu0 0
    %581 = vmatpush.bf16.msra.mxu0 0
    %582 = vmatpush.bf16.msra.mxu0 0
    %583 = vmatpush.bf16.msra.mxu0 0
    %584 = vmatpush.bf16.msra.mxu0 %v572
    %585 = vmatmul.bf16.gmra.mxu0 %v575
    %v586 = vpop.f32.mrf.mxu0
    %v587 = vadd.f32 0.0, %v586
    %v588 = vpop.f32.mrf.mxu0
    %589 = vdwg.mxu0
    %v592 = vunpack.c.l.b16 %v175
    %v593 = vunpack.c.l.b16 %v176
    %v594 = vpack.c.b16 %v593, %v592
    %v597 = vsel %vm268, %v334, 0
    %599 = vmatpush.bf16.msra.mxu0 0
    %600 = vmatpush.bf16.msra.mxu0 0
    %601 = vmatpush.bf16.msra.mxu0 0
    %602 = vmatpush.bf16.msra.mxu0 0
    %603 = vmatpush.bf16.msra.mxu0 0
    %604 = vmatpush.bf16.msra.mxu0 0
    %605 = vmatpush.bf16.msra.mxu0 0
    %606 = vmatpush.bf16.msra.mxu0 %v594
    %607 = vmatmul.bf16.gmra.mxu0 %v597
    %v608 = vpop.f32.mrf.mxu0
    %v609 = vadd.f32 %v587, %v608
    %v610 = vpop.f32.mrf.mxu0
    %611 = vdwg.mxu0
    %v612 = vpack.c.bf16 %v443, %v443
    %v613 = vpack.c.bf16 %v471, %v471
    %v614 = vpack.c.bf16 %v499, %v499
    %v616 = vsel %vm268, %v612, 0
    %v619 = vsel %vm268, %v613, 0
    %621 = vmatpush.bf16.xpose.msra.mxu0 0
    %622 = vmatpush.bf16.xpose.msra.mxu0 0
    %623 = vmatpush.bf16.xpose.msra.mxu0 0
    %624 = vmatpush.bf16.xpose.msra.mxu0 0
    %625 = vmatpush.bf16.xpose.msra.mxu0 0
    %626 = vmatpush.bf16.xpose.msra.mxu0 0
    %627 = vmatpush.bf16.xpose.msra.mxu0 0
    %628 = vmatpush.bf16.xpose.msra.mxu0 %v619
    %629 = vmatmul.bf16.gmra.mxu0 %v616
    %v630 = vpop.f32.mrf.mxu0
    %v631 = vadd.f32 %v338, %v630
    %v632 = vpop.f32.mrf.mxu0
    %633 = vdwg.mxu0
    %v634 = vsel %vm288, %v631, -inf
    %635 = vmax.xlane.f32.xlu0 %v634
    %v636 = vpop.xlane.xlu0 %635
    %v637 = vsub.f32 %v631, %v636
    %v638 = vmul.f32 %v637, 1.442695
    %v639 = vpow.pop %v638
    %v640 = vsel %vm288, %v639, 0.0
    %641 = vadd.xlane.f32.xlu0 %v640
    %v642 = vpop.xlane.xlu0 %641
    %v643 = vrcp.pop %v642
    %v644 = vmul.f32 %v642, %v643
    %v645 = vsub.f32 1.0, %v644
    %v646 = vmul.f32 %v643, %v645
    %v647 = vadd.f32 %v643, %v646
    %vm648 = vweird.f32 %v642
    %vm649 = vweird.f32 %v643
    %vm650 = vmor %vm648, %vm649
    %v651 = vsel %vm650, %v643, %v647
    %v652 = vand.u32 2147483647, %v642
    %vm653 = vcmp.eq.f32.partialorder %v652, 8.507059e+37
    %v654 = vand.u32 %v642, 2147483648
    %v655 = vor.u32 1.1754944e-38, %v654
    %v656 = vsel %vm653, %v655, %v651
    %v657 = vmul.f32 %v639, %v656
    %v658 = vpack.c.bf16 %v657, %v657
    %v660 = vsel %vm288, %v658, 0
    %v663 = vsel %vm317, %v614, 0
    %665 = vmatpush.bf16.msra.mxu0 0
    %666 = vmatpush.bf16.msra.mxu0 0
    %667 = vmatpush.bf16.msra.mxu0 0
    %668 = vmatpush.bf16.msra.mxu0 0
    %669 = vmatpush.bf16.msra.mxu0 0
    %670 = vmatpush.bf16.msra.mxu0 0
    %671 = vmatpush.bf16.msra.mxu0 0
    %672 = vmatpush.bf16.msra.mxu0 %v663
    %673 = vmatmul.bf16.gmra.mxu0 %v660
    %v674 = vpop.f32.mrf.mxu0
    %v675 = vadd.f32 0.0, %v674
    %v676 = vpop.f32.mrf.mxu0
    %677 = vdwg.mxu0
    %v678 = vpack.c.bf16 %v675, %v675
    %v680 = vsel %vm268, %v678, 0
    %682 = vmatpush.bf16.msra.mxu0 0
    %683 = vmatpush.bf16.msra.mxu0 0
    %684 = vmatpush.bf16.msra.mxu0 0
    %685 = vmatpush.bf16.msra.mxu0 0
    %686 = vmatpush.bf16.msra.mxu0 0
    %687 = vmatpush.bf16.msra.mxu0 0
    %688 = vmatpush.bf16.msra.mxu0 0
    %689 = vmatpush.bf16.msra.mxu0 %v572
    %690 = vmatmul.bf16.gmra.mxu0 %v680
    %v691 = vpop.f32.mrf.mxu0
    %v692 = vadd.f32 0.0, %v691
    %v693 = vpop.f32.mrf.mxu0
    %694 = vdwg.mxu0
    %v696 = vsel %vm268, %v402, 0
    %698 = vmatpush.bf16.msra.mxu0 0
    %699 = vmatpush.bf16.msra.mxu0 0
    %700 = vmatpush.bf16.msra.mxu0 0
    %701 = vmatpush.bf16.msra.mxu0 0
    %702 = vmatpush.bf16.msra.mxu0 0
    %703 = vmatpush.bf16.msra.mxu0 0
    %704 = vmatpush.bf16.msra.mxu0 0
    %705 = vmatpush.bf16.msra.mxu0 %v594
    %706 = vmatmul.bf16.gmra.mxu0 %v696
    %v707 = vpop.f32.mrf.mxu0
    %v708 = vadd.f32 %v692, %v707
    %v709 = vpop.f32.mrf.mxu0
    %710 = vdwg.mxu0
    %v711 = vld [vmem:[%s4 + $0x8] sm:$0x1]
    %v712 = vperm.slane %v711, 0
    %v713 = vadd.f32 %v609, %v712
    %v714 = vadd.f32 %v708, %v712
    %v715 = vadd.f32 %v713, %v156
    %v716 = vadd.f32 %v714, %v157
    %v717 = vsel %vm98, %v715, 0.0
    %718 = vadd.xlane.f32.xlu0 %v717
    %v719 = vpop.xlane.xlu0 %718
    %v720 = vsel %vm98, %v716, 0.0
    %721 = vadd.xlane.f32.xlu0 %v720
    %v722 = vpop.xlane.xlu0 %721
    %v723 = vmul.f32 %v719, %v111
    %v724 = vmul.f32 %v722, %v111
    %v725 = vsub.f32 %v715, %v723
    %v726 = vsub.f32 %v716, %v724
    %v727 = vmul.f32 %v725, %v725
    %v728 = vmul.f32 %v726, %v726
    %v729 = vsel %vm98, %v727, 0.0
    %730 = vadd.xlane.f32.xlu0 %v729
    %v731 = vpop.xlane.xlu0 %730
    %v732 = vsel %vm98, %v728, 0.0
    %733 = vadd.xlane.f32.xlu0 %v732
    %v734 = vpop.xlane.xlu0 %733
    %v735 = vmul.f32 %v731, %v111
    %v736 = vmul.f32 %v734, %v111
    %v737 = vadd.f32 %v735, 1e-12
    %v738 = vadd.f32 %v736, 1e-12
    %v739 = vrsqrt.pop %v737
    %v740 = vmul.f32 %v739, %v737
    %v741 = vmul.f32 %v740, %v739
    %v742 = vmul.f32 0.5, %v741
    %v743 = vsub.f32 1.5, %v742
    %v744 = vmul.f32 %v739, %v743
    %vm745 = vweird.f32 %v737
    %vm746 = vweird.f32 %v739
    %vm747 = vmor %vm745, %vm746
    %v748 = vsel %vm747, %v739, %v744
    %v749 = vrsqrt.pop %v738
    %v750 = vmul.f32 %v749, %v738
    %v751 = vmul.f32 %v750, %v749
    %v752 = vmul.f32 0.5, %v751
    %v753 = vsub.f32 1.5, %v752
    %v754 = vmul.f32 %v749, %v753
    %vm755 = vweird.f32 %v738
    %vm756 = vweird.f32 %v749
    %vm757 = vmor %vm755, %vm756
    %v758 = vsel %vm757, %v749, %v754
    %v759 = vmul.f32 %v725, %v748
    %v760 = vmul.f32 %v726, %v758
    %v761 = vld [vmem:[%s4 + $0x9] sm:$0x1]
    %v762 = vperm.slane %v761, 0
    %v763 = vmul.f32 %v759, %v762
    %v764 = vmul.f32 %v760, %v762
    %v765 = vld [vmem:[%s4 + $0xa] sm:$0x1]
    %v766 = vperm.slane %v765, 0
    %v767 = vadd.f32 %v763, %v766
    %v768 = vadd.f32 %v764, %v766
    %v769 = vld [vmem:[%s3 + $0x70] sm:$0xf]
    %v770 = vld [vmem:[%s3 + $0x74] sm:$0xf]
    %v771 = vld [vmem:[%s3 + $0x78] sm:$0xf]
    %v772 = vld [vmem:[%s3 + $0x7c] sm:$0xf]
    %v773 = vld [vmem:[%s3 + $0x80] sm:$0xf]
    %v774 = vld [vmem:[%s3 + $0x84] sm:$0xf]
    %v775 = vld [vmem:[%s3 + $0x88] sm:$0xf]
    %v776 = vld [vmem:[%s3 + $0x8c] sm:$0xf]
    %v777 = vld [vmem:[%s3 + $0x90] sm:$0xf]
    %v778 = vld [vmem:[%s3 + $0x94] sm:$0xf]
    %v779 = vld [vmem:[%s3 + $0x98] sm:$0xf]
    %v780 = vld [vmem:[%s3 + $0x9c] sm:$0xf]
    %v781 = vpack.c.bf16 %v768, %v767
    %v782 = vld [vmem:[%s4 + $0xb] sm:$0x1]
    %v783 = vperm.slane %v782, 0
    %v788 = vunpack.c.l.b16 %v769
    %v789 = vunpack.c.l.b16 %v770
    %v790 = vunpack.c.l.b16 %v771
    %v791 = vunpack.c.l.b16 %v772
    %v792 = vpack.c.b16 %v789, %v788
    %v793 = vpack.c.b16 %v791, %v790
    %v797 = vsel %vm98, %v781, 0
    %799 = vmatpush.bf16.msra.mxu0 0
    %800 = vmatpush.bf16.msra.mxu0 0
    %801 = vmatpush.bf16.msra.mxu0 0
    %802 = vmatpush.bf16.msra.mxu0 0
    %803 = vmatpush.bf16.msra.mxu0 0
    %804 = vmatpush.bf16.msra.mxu0 0
    %805 = vmatpush.bf16.msra.mxu0 %v793
    %806 = vmatpush.bf16.msra.mxu0 %v792
    %807 = vmatmul.bf16.gmra.mxu0 %v797
    %v808 = vpop.f32.mrf.mxu0
    %v809 = vadd.f32 %v783, %v808
    %v810 = vpop.f32.mrf.mxu0
    %v811 = vadd.f32 %v783, %v810
    %812 = vdwg.mxu0
    %v813 = vmul.f32 %v809, 0.5
    %v814 = vmul.f32 %v811, 0.5
    %v815 = vmul.f32 %v809, 0.044715
    %v816 = vmul.f32 %v811, 0.044715
    %v817 = vmul.f32 %v815, %v809
    %v818 = vmul.f32 %v816, %v811
    %v819 = vmul.f32 %v817, %v809
    %v820 = vmul.f32 %v818, %v811
    %v821 = vadd.f32 %v809, %v819
    %v822 = vadd.f32 %v811, %v820
    %v823 = vmul.f32 %v821, 0.7978846
    %v824 = vmul.f32 %v822, 0.7978846
    %v825 = vtanh.pop %v823
    %v826 = vtanh.pop %v824
    %v827 = vadd.f32 %v825, 1.0
    %v828 = vadd.f32 %v826, 1.0
    %v829 = vmul.f32 %v813, %v827
    %v830 = vmul.f32 %v814, %v828
    %v831 = vpack.c.bf16 %v830, %v829
    %v832 = vld [vmem:[%s4 + $0xc] sm:$0x1]
    %v833 = vperm.slane %v832, 0
    %v842 = vunpack.c.l.b16 %v773
    %v843 = vunpack.c.l.b16 %v774
    %v844 = vunpack.c.l.b16 %v775
    %v845 = vunpack.c.l.b16 %v776
    %v846 = vunpack.c.l.b16 %v777
    %v847 = vunpack.c.l.b16 %v778
    %v848 = vunpack.c.l.b16 %v779
    %v849 = vunpack.c.l.b16 %v780
    %v850 = vpack.c.b16 %v843, %v842
    %v851 = vpack.c.b16 %v845, %v844
    %v852 = vpack.c.b16 %v847, %v846
    %v853 = vpack.c.b16 %v849, %v848
    %vm858 = vcmask 523264
    %v860 = vsel %vm858, %v831, 0
    %862 = vmatpush.bf16.msra.mxu0 0
    %863 = vmatpush.bf16.msra.mxu0 0
    %864 = vmatpush.bf16.msra.mxu0 0
    %865 = vmatpush.bf16.msra.mxu0 0
    %866 = vmatpush.bf16.msra.mxu0 %v853
    %867 = vmatpush.bf16.msra.mxu0 %v852
    %868 = vmatpush.bf16.msra.mxu0 %v851
    %869 = vmatpush.bf16.msra.mxu0 %v850
    %870 = vmatmul.bf16.gmra.mxu0 %v860
    %v871 = vpop.f32.mrf.mxu0
    %v872 = vadd.f32 %v833, %v871
    %v873 = vpop.f32.mrf.mxu0
    %v874 = vadd.f32 %v833, %v873
    %875 = vdwg.mxu0
    %v876 = vadd.f32 %v872, %v767
    %v877 = vadd.f32 %v874, %v768
    %v878 = vsel %vm98, %v876, 0.0
    %879 = vadd.xlane.f32.xlu0 %v878
    %v880 = vpop.xlane.xlu0 %879
    %v881 = vsel %vm98, %v877, 0.0
    %882 = vadd.xlane.f32.xlu0 %v881
    %v883 = vpop.xlane.xlu0 %882
    %v884 = vmul.f32 %v880, %v111
    %v885 = vmul.f32 %v883, %v111
    %v886 = vsub.f32 %v876, %v884
    %v887 = vsub.f32 %v877, %v885
    %v888 = vmul.f32 %v886, %v886
    %v889 = vmul.f32 %v887, %v887
    %v890 = vsel %vm98, %v888, 0.0
    %891 = vadd.xlane.f32.xlu0 %v890
    %v892 = vpop.xlane.xlu0 %891
    %v893 = vsel %vm98, %v889, 0.0
    %894 = vadd.xlane.f32.xlu0 %v893
    %v895 = vpop.xlane.xlu0 %894
    %v896 = vmul.f32 %v892, %v111
    %v897 = vmul.f32 %v895, %v111
    %v898 = vadd.f32 %v896, 1e-12
    %v899 = vadd.f32 %v897, 1e-12
    %v900 = vrsqrt.pop %v898
    %v901 = vmul.f32 %v900, %v898
    %v902 = vmul.f32 %v901, %v900
    %v903 = vmul.f32 0.5, %v902
    %v904 = vsub.f32 1.5, %v903
    %v905 = vmul.f32 %v900, %v904
    %vm906 = vweird.f32 %v898
    %vm907 = vweird.f32 %v900
    %vm908 = vmor %vm906, %vm907
    %v909 = vsel %vm908, %v900, %v905
    %v910 = vrsqrt.pop %v899
    %v911 = vmul.f32 %v910, %v899
    %v912 = vmul.f32 %v911, %v910
    %v913 = vmul.f32 0.5, %v912
    %v914 = vsub.f32 1.5, %v913
    %v915 = vmul.f32 %v910, %v914
    %vm916 = vweird.f32 %v899
    %vm917 = vweird.f32 %v910
    %vm918 = vmor %vm916, %vm917
    %v919 = vsel %vm918, %v910, %v915
    %v920 = vmul.f32 %v886, %v909
    %v921 = vmul.f32 %v887, %v919
    %v922 = vld [vmem:[%s4 + $0xd] sm:$0x1]
    %v923 = vperm.slane %v922, 0
    %v924 = vmul.f32 %v920, %v923
    %v925 = vmul.f32 %v921, %v923
    %v926 = vld [vmem:[%s4 + $0xe] sm:$0x1]
    %v927 = vperm.slane %v926, 0
    %v928 = vadd.f32 %v924, %v927
    %v929 = vadd.f32 %v925, %v927
    %v930 = vpack.c.bf16 %v929, %v928
    %v931 = vld [vmem:[%s3 + $0xa0] sm:$0xf]
    %v932 = vld [vmem:[%s3 + $0xa4] sm:$0xf]
    %v933 = vld [vmem:[%s3 + $0xa8] sm:$0xf]
    %v934 = vld [vmem:[%s3 + $0xac] sm:$0xf]
    %v935 = vld [vmem:[%s3 + $0xc0] sm:$0xf]
    %v936 = vld [vmem:[%s3 + $0xc4] sm:$0xf]
    %v937 = vld [vmem:[%s3 + $0xc8] sm:$0xf]
    %v938 = vld [vmem:[%s3 + $0xcc] sm:$0xf]
    %v939 = vld [vmem:[%s3 + $0xe0] sm:$0xf]
    %v940 = vld [vmem:[%s3 + $0xe4] sm:$0xf]
    %v941 = vld [vmem:[%s3 + $0xe8] sm:$0xf]
    %v942 = vld [vmem:[%s3 + $0xec] sm:$0xf]
    %v943 = vld [vmem:[%s3 + $0x100] sm:$0xf]
    %v944 = vld [vmem:[%s3 + $0x104] sm:$0xf]
    %v945 = vld [vmem:[%s4 + $0xf] sm:$0x1]
    %v946 = vperm.slane %v945, 0
    %v951 = vunpack.c.l.b16 %v931
    %v952 = vunpack.c.l.b16 %v932
    %v953 = vunpack.c.l.b16 %v933
    %v954 = vunpack.c.l.b16 %v934
    %v955 = vpack.c.b16 %v952, %v951
    %v956 = vpack.c.b16 %v954, %v953
    %v960 = vsel %vm98, %v930, 0
    %962 = vmatpush.bf16.msra.mxu0 0
    %963 = vmatpush.bf16.msra.mxu0 0
    %964 = vmatpush.bf16.msra.mxu0 0
    %965 = vmatpush.bf16.msra.mxu0 0
    %966 = vmatpush.bf16.msra.mxu0 0
    %967 = vmatpush.bf16.msra.mxu0 0
    %968 = vmatpush.bf16.msra.mxu0 %v956
    %969 = vmatpush.bf16.msra.mxu0 %v955
    %970 = vmatmul.bf16.gmra.mxu0 %v960
    %v971 = vpop.f32.mrf.mxu0
    %v972 = vadd.f32 %v946, %v971
    %v973 = vpop.f32.mrf.mxu0
    %v974 = vadd.f32 %v946, %v973
    %975 = vdwg.mxu0
    %v976 = vld [vmem:[%s4 + $0x11] sm:$0x1]
    %v977 = vperm.slane %v976, 0
    %v982 = vunpack.c.l.b16 %v935
    %v983 = vunpack.c.l.b16 %v936
    %v984 = vunpack.c.l.b16 %v937
    %v985 = vunpack.c.l.b16 %v938
    %v986 = vpack.c.b16 %v983, %v982
    %v987 = vpack.c.b16 %v985, %v984
    %990 = vmatpush.bf16.msra.mxu0 0
    %991 = vmatpush.bf16.msra.mxu0 0
    %992 = vmatpush.bf16.msra.mxu0 0
    %993 = vmatpush.bf16.msra.mxu0 0
    %994 = vmatpush.bf16.msra.mxu0 0
    %995 = vmatpush.bf16.msra.mxu0 0
    %996 = vmatpush.bf16.msra.mxu0 %v987
    %997 = vmatpush.bf16.msra.mxu0 %v986
    %998 = vmatmul.bf16.gmra.mxu0 %v960
    %v999 = vpop.f32.mrf.mxu0
    %v1000 = vadd.f32 %v977, %v999
    %v1001 = vpop.f32.mrf.mxu0
    %v1002 = vadd.f32 %v977, %v1001
    %1003 = vdwg.mxu0
    %v1004 = vld [vmem:[%s4 + $0x13] sm:$0x1]
    %v1005 = vperm.slane %v1004, 0
    %v1010 = vunpack.c.l.b16 %v939
    %v1011 = vunpack.c.l.b16 %v940
    %v1012 = vunpack.c.l.b16 %v941
    %v1013 = vunpack.c.l.b16 %v942
    %v1014 = vpack.c.b16 %v1011, %v1010
    %v1015 = vpack.c.b16 %v1013, %v1012
    %1018 = vmatpush.bf16.msra.mxu0 0
    %1019 = vmatpush.bf16.msra.mxu0 0
    %1020 = vmatpush.bf16.msra.mxu0 0
    %1021 = vmatpush.bf16.msra.mxu0 0
    %1022 = vmatpush.bf16.msra.mxu0 0
    %1023 = vmatpush.bf16.msra.mxu0 0
    %1024 = vmatpush.bf16.msra.mxu0 %v1015
    %1025 = vmatpush.bf16.msra.mxu0 %v1014
    %1026 = vmatmul.bf16.gmra.mxu0 %v960
    %v1027 = vpop.f32.mrf.mxu0
    %v1028 = vadd.f32 %v1005, %v1027
    %v1029 = vpop.f32.mrf.mxu0
    %v1030 = vadd.f32 %v1005, %v1029
    %1031 = vdwg.mxu0
    %v1032 = vpack.c.bf16 %v972, %v972
    %v1033 = vpack.c.bf16 %v1000, %v1000
    %v1034 = vpack.c.bf16 %v1028, %v1028
    %v1036 = vsel %vm268, %v1032, 0
    %v1039 = vsel %vm268, %v1033, 0
    %1041 = vmatpush.bf16.xpose.msra.mxu0 0
    %1042 = vmatpush.bf16.xpose.msra.mxu0 0
    %1043 = vmatpush.bf16.xpose.msra.mxu0 0
    %1044 = vmatpush.bf16.xpose.msra.mxu0 0
    %1045 = vmatpush.bf16.xpose.msra.mxu0 0
    %1046 = vmatpush.bf16.xpose.msra.mxu0 0
    %1047 = vmatpush.bf16.xpose.msra.mxu0 0
    %1048 = vmatpush.bf16.xpose.msra.mxu0 %v1039
    %1049 = vmatmul.bf16.gmra.mxu0 %v1036
    %v1050 = vpop.f32.mrf.mxu0
    %v1051 = vadd.f32 %v267, %v1050
    %v1052 = vpop.f32.mrf.mxu0
    %1053 = vdwg.mxu0
    %v1054 = vsel %vm288, %v1051, -inf
    %1055 = vmax.xlane.f32.xlu0 %v1054
    %v1056 = vpop.xlane.xlu0 %1055
    %v1057 = vsub.f32 %v1051, %v1056
    %v1058 = vmul.f32 %v1057, 1.442695
    %v1059 = vpow.pop %v1058
    %v1060 = vsel %vm288, %v1059, 0.0
    %1061 = vadd.xlane.f32.xlu0 %v1060
    %v1062 = vpop.xlane.xlu0 %1061
    %v1063 = vrcp.pop %v1062
    %v1064 = vmul.f32 %v1062, %v1063
    %v1065 = vsub.f32 1.0, %v1064
    %v1066 = vmul.f32 %v1063, %v1065
    %v1067 = vadd.f32 %v1063, %v1066
    %vm1068 = vweird.f32 %v1062
    %vm1069 = vweird.f32 %v1063
    %vm1070 = vmor %vm1068, %vm1069
    %v1071 = vsel %vm1070, %v1063, %v1067
    %v1072 = vand.u32 2147483647, %v1062
    %vm1073 = vcmp.eq.f32.partialorder %v1072, 8.507059e+37
    %v1074 = vand.u32 %v1062, 2147483648
    %v1075 = vor.u32 1.1754944e-38, %v1074
    %v1076 = vsel %vm1073, %v1075, %v1071
    %v1077 = vmul.f32 %v1059, %v1076
    %v1078 = vpack.c.bf16 %v1077, %v1077
    %v1080 = vsel %vm288, %v1078, 0
    %v1083 = vsel %vm317, %v1034, 0
    %1085 = vmatpush.bf16.msra.mxu0 0
    %1086 = vmatpush.bf16.msra.mxu0 0
    %1087 = vmatpush.bf16.msra.mxu0 0
    %1088 = vmatpush.bf16.msra.mxu0 0
    %1089 = vmatpush.bf16.msra.mxu0 0
    %1090 = vmatpush.bf16.msra.mxu0 0
    %1091 = vmatpush.bf16.msra.mxu0 0
    %1092 = vmatpush.bf16.msra.mxu0 %v1083
    %1093 = vmatmul.bf16.gmra.mxu0 %v1080
    %v1094 = vpop.f32.mrf.mxu0
    %v1095 = vadd.f32 0.0, %v1094
    %v1096 = vpop.f32.mrf.mxu0
    %1097 = vdwg.mxu0
    %v1098 = vpack.c.bf16 %v1095, %v1095
    %v1099 = vpack.c.bf16 %v974, %v974
    %v1100 = vpack.c.bf16 %v1002, %v1002
    %v1101 = vpack.c.bf16 %v1030, %v1030
    %v1103 = vsel %vm268, %v1099, 0
    %v1106 = vsel %vm268, %v1100, 0
    %1108 = vmatpush.bf16.xpose.msra.mxu0 0
    %1109 = vmatpush.bf16.xpose.msra.mxu0 0
    %1110 = vmatpush.bf16.xpose.msra.mxu0 0
    %1111 = vmatpush.bf16.xpose.msra.mxu0 0
    %1112 = vmatpush.bf16.xpose.msra.mxu0 0
    %1113 = vmatpush.bf16.xpose.msra.mxu0 0
    %1114 = vmatpush.bf16.xpose.msra.mxu0 0
    %1115 = vmatpush.bf16.xpose.msra.mxu0 %v1106
    %1116 = vmatmul.bf16.gmra.mxu0 %v1103
    %v1117 = vpop.f32.mrf.mxu0
    %v1118 = vadd.f32 %v338, %v1117
    %v1119 = vpop.f32.mrf.mxu0
    %1120 = vdwg.mxu0
    %v1121 = vsel %vm288, %v1118, -inf
    %1122 = vmax.xlane.f32.xlu0 %v1121
    %v1123 = vpop.xlane.xlu0 %1122
    %v1124 = vsub.f32 %v1118, %v1123
    %v1125 = vmul.f32 %v1124, 1.442695
    %v1126 = vpow.pop %v1125
    %v1127 = vsel %vm288, %v1126, 0.0
    %1128 = vadd.xlane.f32.xlu0 %v1127
    %v1129 = vpop.xlane.xlu0 %1128
    %v1130 = vrcp.pop %v1129
    %v1131 = vmul.f32 %v1129, %v1130
    %v1132 = vsub.f32 1.0, %v1131
    %v1133 = vmul.f32 %v1130, %v1132
    %v1134 = vadd.f32 %v1130, %v1133
    %vm1135 = vweird.f32 %v1129
    %vm1136 = vweird.f32 %v1130
    %vm1137 = vmor %vm1135, %vm1136
    %v1138 = vsel %vm1137, %v1130, %v1134
    %v1139 = vand.u32 2147483647, %v1129
    %vm1140 = vcmp.eq.f32.partialorder %v1139, 8.507059e+37
    %v1141 = vand.u32 %v1129, 2147483648
    %v1142 = vor.u32 1.1754944e-38, %v1141
    %v1143 = vsel %vm1140, %v1142, %v1138
    %v1144 = vmul.f32 %v1126, %v1143
    %v1145 = vpack.c.bf16 %v1144, %v1144
    %v1147 = vsel %vm288, %v1145, 0
    %v1150 = vsel %vm317, %v1101, 0
    %1152 = vmatpush.bf16.msra.mxu0 0
    %1153 = vmatpush.bf16.msra.mxu0 0
    %1154 = vmatpush.bf16.msra.mxu0 0
    %1155 = vmatpush.bf16.msra.mxu0 0
    %1156 = vmatpush.bf16.msra.mxu0 0
    %1157 = vmatpush.bf16.msra.mxu0 0
    %1158 = vmatpush.bf16.msra.mxu0 0
    %1159 = vmatpush.bf16.msra.mxu0 %v1150
    %1160 = vmatmul.bf16.gmra.mxu0 %v1147
    %v1161 = vpop.f32.mrf.mxu0
    %v1162 = vadd.f32 0.0, %v1161
    %v1163 = vpop.f32.mrf.mxu0
    %1164 = vdwg.mxu0
    %v1165 = vpack.c.bf16 %v1162, %v1162
    %v1166 = vld [vmem:[%s3 + $0xb0] sm:$0xf]
    %v1167 = vld [vmem:[%s3 + $0xb4] sm:$0xf]
    %v1168 = vld [vmem:[%s3 + $0xb8] sm:$0xf]
    %v1169 = vld [vmem:[%s3 + $0xbc] sm:$0xf]
    %v1170 = vld [vmem:[%s3 + $0xd0] sm:$0xf]
    %v1171 = vld [vmem:[%s3 + $0xd4] sm:$0xf]
    %v1172 = vld [vmem:[%s3 + $0xd8] sm:$0xf]
    %v1173 = vld [vmem:[%s3 + $0xdc] sm:$0xf]
    %v1174 = vld [vmem:[%s3 + $0xf0] sm:$0xf]
    %v1175 = vld [vmem:[%s3 + $0xf4] sm:$0xf]
    %v1176 = vld [vmem:[%s3 + $0xf8] sm:$0xf]
    %v1177 = vld [vmem:[%s3 + $0xfc] sm:$0xf]
    %v1178 = vld [vmem:[%s3 + $0x108] sm:$0xf]
    %v1179 = vld [vmem:[%s3 + $0x10c] sm:$0xf]
    %v1180 = vld [vmem:[%s4 + $0x10] sm:$0x1]
    %v1181 = vperm.slane %v1180, 0
    %v1186 = vunpack.c.l.b16 %v1166
    %v1187 = vunpack.c.l.b16 %v1167
    %v1188 = vunpack.c.l.b16 %v1168
    %v1189 = vunpack.c.l.b16 %v1169
    %v1190 = vpack.c.b16 %v1187, %v1186
    %v1191 = vpack.c.b16 %v1189, %v1188
    %1194 = vmatpush.bf16.msra.mxu0 0
    %1195 = vmatpush.bf16.msra.mxu0 0
    %1196 = vmatpush.bf16.msra.mxu0 0
    %1197 = vmatpush.bf16.msra.mxu0 0
    %1198 = vmatpush.bf16.msra.mxu0 0
    %1199 = vmatpush.bf16.msra.mxu0 0
    %1200 = vmatpush.bf16.msra.mxu0 %v1191
    %1201 = vmatpush.bf16.msra.mxu0 %v1190
    %1202 = vmatmul.bf16.gmra.mxu0 %v960
    %v1203 = vpop.f32.mrf.mxu0
    %v1204 = vadd.f32 %v1181, %v1203
    %v1205 = vpop.f32.mrf.mxu0
    %v1206 = vadd.f32 %v1181, %v1205
    %1207 = vdwg.mxu0
    %v1208 = vld [vmem:[%s4 + $0x12] sm:$0x1]
    %v1209 = vperm.slane %v1208, 0
    %v1214 = vunpack.c.l.b16 %v1170
    %v1215 = vunpack.c.l.b16 %v1171
    %v1216 = vunpack.c.l.b16 %v1172
    %v1217 = vunpack.c.l.b16 %v1173
    %v1218 = vpack.c.b16 %v1215, %v1214
    %v1219 = vpack.c.b16 %v1217, %v1216
    %1222 = vmatpush.bf16.msra.mxu0 0
    %1223 = vmatpush.bf16.msra.mxu0 0
    %1224 = vmatpush.bf16.msra.mxu0 0
    %1225 = vmatpush.bf16.msra.mxu0 0
    %1226 = vmatpush.bf16.msra.mxu0 0
    %1227 = vmatpush.bf16.msra.mxu0 0
    %1228 = vmatpush.bf16.msra.mxu0 %v1219
    %1229 = vmatpush.bf16.msra.mxu0 %v1218
    %1230 = vmatmul.bf16.gmra.mxu0 %v960
    %v1231 = vpop.f32.mrf.mxu0
    %v1232 = vadd.f32 %v1209, %v1231
    %v1233 = vpop.f32.mrf.mxu0
    %v1234 = vadd.f32 %v1209, %v1233
    %1235 = vdwg.mxu0
    %v1236 = vld [vmem:[%s4 + $0x14] sm:$0x1]
    %v1237 = vperm.slane %v1236, 0
    %v1242 = vunpack.c.l.b16 %v1174
    %v1243 = vunpack.c.l.b16 %v1175
    %v1244 = vunpack.c.l.b16 %v1176
    %v1245 = vunpack.c.l.b16 %v1177
    %v1246 = vpack.c.b16 %v1243, %v1242
    %v1247 = vpack.c.b16 %v1245, %v1244
    %1250 = vmatpush.bf16.msra.mxu0 0
    %1251 = vmatpush.bf16.msra.mxu0 0
    %1252 = vmatpush.bf16.msra.mxu0 0
    %1253 = vmatpush.bf16.msra.mxu0 0
    %1254 = vmatpush.bf16.msra.mxu0 0
    %1255 = vmatpush.bf16.msra.mxu0 0
    %1256 = vmatpush.bf16.msra.mxu0 %v1247
    %1257 = vmatpush.bf16.msra.mxu0 %v1246
    %1258 = vmatmul.bf16.gmra.mxu0 %v960
    %v1259 = vpop.f32.mrf.mxu0
    %v1260 = vadd.f32 %v1237, %v1259
    %v1261 = vpop.f32.mrf.mxu0
    %v1262 = vadd.f32 %v1237, %v1261
    %1263 = vdwg.mxu0
    %v1264 = vpack.c.bf16 %v1204, %v1204
    %v1265 = vpack.c.bf16 %v1232, %v1232
    %v1266 = vpack.c.bf16 %v1260, %v1260
    %v1268 = vsel %vm268, %v1264, 0
    %v1271 = vsel %vm268, %v1265, 0
    %1273 = vmatpush.bf16.xpose.msra.mxu0 0
    %1274 = vmatpush.bf16.xpose.msra.mxu0 0
    %1275 = vmatpush.bf16.xpose.msra.mxu0 0
    %1276 = vmatpush.bf16.xpose.msra.mxu0 0
    %1277 = vmatpush.bf16.xpose.msra.mxu0 0
    %1278 = vmatpush.bf16.xpose.msra.mxu0 0
    %1279 = vmatpush.bf16.xpose.msra.mxu0 0
    %1280 = vmatpush.bf16.xpose.msra.mxu0 %v1271
    %1281 = vmatmul.bf16.gmra.mxu0 %v1268
    %v1282 = vpop.f32.mrf.mxu0
    %v1283 = vadd.f32 %v267, %v1282
    %v1284 = vpop.f32.mrf.mxu0
    %1285 = vdwg.mxu0
    %v1286 = vsel %vm288, %v1283, -inf
    %1287 = vmax.xlane.f32.xlu0 %v1286
    %v1288 = vpop.xlane.xlu0 %1287
    %v1289 = vsub.f32 %v1283, %v1288
    %v1290 = vmul.f32 %v1289, 1.442695
    %v1291 = vpow.pop %v1290
    %v1292 = vsel %vm288, %v1291, 0.0
    %1293 = vadd.xlane.f32.xlu0 %v1292
    %v1294 = vpop.xlane.xlu0 %1293
    %v1295 = vrcp.pop %v1294
    %v1296 = vmul.f32 %v1294, %v1295
    %v1297 = vsub.f32 1.0, %v1296
    %v1298 = vmul.f32 %v1295, %v1297
    %v1299 = vadd.f32 %v1295, %v1298
    %vm1300 = vweird.f32 %v1294
    %vm1301 = vweird.f32 %v1295
    %vm1302 = vmor %vm1300, %vm1301
    %v1303 = vsel %vm1302, %v1295, %v1299
    %v1304 = vand.u32 2147483647, %v1294
    %vm1305 = vcmp.eq.f32.partialorder %v1304, 8.507059e+37
    %v1306 = vand.u32 %v1294, 2147483648
    %v1307 = vor.u32 1.1754944e-38, %v1306
    %v1308 = vsel %vm1305, %v1307, %v1303
    %v1309 = vmul.f32 %v1291, %v1308
    %v1310 = vpack.c.bf16 %v1309, %v1309
    %v1312 = vsel %vm288, %v1310, 0
    %v1315 = vsel %vm317, %v1266, 0
    %1317 = vmatpush.bf16.msra.mxu0 0
    %1318 = vmatpush.bf16.msra.mxu0 0
    %1319 = vmatpush.bf16.msra.mxu0 0
    %1320 = vmatpush.bf16.msra.mxu0 0
    %1321 = vmatpush.bf16.msra.mxu0 0
    %1322 = vmatpush.bf16.msra.mxu0 0
    %1323 = vmatpush.bf16.msra.mxu0 0
    %1324 = vmatpush.bf16.msra.mxu0 %v1315
    %1325 = vmatmul.bf16.gmra.mxu0 %v1312
    %v1326 = vpop.f32.mrf.mxu0
    %v1327 = vadd.f32 0.0, %v1326
    %v1328 = vpop.f32.mrf.mxu0
    %1329 = vdwg.mxu0
    %v1330 = vpack.c.bf16 %v1327, %v1327
    %v1333 = vunpack.c.l.b16 %v1178
    %v1334 = vunpack.c.l.b16 %v1179
    %v1335 = vpack.c.b16 %v1334, %v1333
    %v1338 = vsel %vm268, %v1330, 0
    %1340 = vmatpush.bf16.msra.mxu0 0
    %1341 = vmatpush.bf16.msra.mxu0 0
    %1342 = vmatpush.bf16.msra.mxu0 0
    %1343 = vmatpush.bf16.msra.mxu0 0
    %1344 = vmatpush.bf16.msra.mxu0 0
    %1345 = vmatpush.bf16.msra.mxu0 0
    %1346 = vmatpush.bf16.msra.mxu0 0
    %1347 = vmatpush.bf16.msra.mxu0 %v1335
    %1348 = vmatmul.bf16.gmra.mxu0 %v1338
    %v1349 = vpop.f32.mrf.mxu0
    %v1350 = vadd.f32 0.0, %v1349
    %v1351 = vpop.f32.mrf.mxu0
    %1352 = vdwg.mxu0
    %v1355 = vunpack.c.l.b16 %v943
    %v1356 = vunpack.c.l.b16 %v944
    %v1357 = vpack.c.b16 %v1356, %v1355
    %v1360 = vsel %vm268, %v1098, 0
    %1362 = vmatpush.bf16.msra.mxu0 0
    %1363 = vmatpush.bf16.msra.mxu0 0
    %1364 = vmatpush.bf16.msra.mxu0 0
    %1365 = vmatpush.bf16.msra.mxu0 0
    %1366 = vmatpush.bf16.msra.mxu0 0
    %1367 = vmatpush.bf16.msra.mxu0 0
    %1368 = vmatpush.bf16.msra.mxu0 0
    %1369 = vmatpush.bf16.msra.mxu0 %v1357
    %1370 = vmatmul.bf16.gmra.mxu0 %v1360
    %v1371 = vpop.f32.mrf.mxu0
    %v1372 = vadd.f32 %v1350, %v1371
    %v1373 = vpop.f32.mrf.mxu0
    %1374 = vdwg.mxu0
    %v1375 = vpack.c.bf16 %v1206, %v1206
    %v1376 = vpack.c.bf16 %v1234, %v1234
    %v1377 = vpack.c.bf16 %v1262, %v1262
    %v1379 = vsel %vm268, %v1375, 0
    %v1382 = vsel %vm268, %v1376, 0
    %1384 = vmatpush.bf16.xpose.msra.mxu0 0
    %1385 = vmatpush.bf16.xpose.msra.mxu0 0
    %1386 = vmatpush.bf16.xpose.msra.mxu0 0
    %1387 = vmatpush.bf16.xpose.msra.mxu0 0
    %1388 = vmatpush.bf16.xpose.msra.mxu0 0
    %1389 = vmatpush.bf16.xpose.msra.mxu0 0
    %1390 = vmatpush.bf16.xpose.msra.mxu0 0
    %1391 = vmatpush.bf16.xpose.msra.mxu0 %v1382
    %1392 = vmatmul.bf16.gmra.mxu0 %v1379
    %v1393 = vpop.f32.mrf.mxu0
    %v1394 = vadd.f32 %v338, %v1393
    %v1395 = vpop.f32.mrf.mxu0
    %1396 = vdwg.mxu0
    %v1397 = vsel %vm288, %v1394, -inf
    %1398 = vmax.xlane.f32.xlu0 %v1397
    %v1399 = vpop.xlane.xlu0 %1398
    %v1400 = vsub.f32 %v1394, %v1399
    %v1401 = vmul.f32 %v1400, 1.442695
    %v1402 = vpow.pop %v1401
    %v1403 = vsel %vm288, %v1402, 0.0
    %1404 = vadd.xlane.f32.xlu0 %v1403
    %v1405 = vpop.xlane.xlu0 %1404
    %v1406 = vrcp.pop %v1405
    %v1407 = vmul.f32 %v1405, %v1406
    %v1408 = vsub.f32 1.0, %v1407
    %v1409 = vmul.f32 %v1406, %v1408
    %v1410 = vadd.f32 %v1406, %v1409
    %vm1411 = vweird.f32 %v1405
    %vm1412 = vweird.f32 %v1406
    %vm1413 = vmor %vm1411, %vm1412
    %v1414 = vsel %vm1413, %v1406, %v1410
    %v1415 = vand.u32 2147483647, %v1405
    %vm1416 = vcmp.eq.f32.partialorder %v1415, 8.507059e+37
    %v1417 = vand.u32 %v1405, 2147483648
    %v1418 = vor.u32 1.1754944e-38, %v1417
    %v1419 = vsel %vm1416, %v1418, %v1414
    %v1420 = vmul.f32 %v1402, %v1419
    %v1421 = vpack.c.bf16 %v1420, %v1420
    %v1423 = vsel %vm288, %v1421, 0
    %v1426 = vsel %vm317, %v1377, 0
    %1428 = vmatpush.bf16.msra.mxu0 0
    %1429 = vmatpush.bf16.msra.mxu0 0
    %1430 = vmatpush.bf16.msra.mxu0 0
    %1431 = vmatpush.bf16.msra.mxu0 0
    %1432 = vmatpush.bf16.msra.mxu0 0
    %1433 = vmatpush.bf16.msra.mxu0 0
    %1434 = vmatpush.bf16.msra.mxu0 0
    %1435 = vmatpush.bf16.msra.mxu0 %v1426
    %1436 = vmatmul.bf16.gmra.mxu0 %v1423
    %v1437 = vpop.f32.mrf.mxu0
    %v1438 = vadd.f32 0.0, %v1437
    %v1439 = vpop.f32.mrf.mxu0
    %1440 = vdwg.mxu0
    %v1441 = vpack.c.bf16 %v1438, %v1438
    %v1443 = vsel %vm268, %v1441, 0
    %1445 = vmatpush.bf16.msra.mxu0 0
    %1446 = vmatpush.bf16.msra.mxu0 0
    %1447 = vmatpush.bf16.msra.mxu0 0
    %1448 = vmatpush.bf16.msra.mxu0 0
    %1449 = vmatpush.bf16.msra.mxu0 0
    %1450 = vmatpush.bf16.msra.mxu0 0
    %1451 = vmatpush.bf16.msra.mxu0 0
    %1452 = vmatpush.bf16.msra.mxu0 %v1335
    %1453 = vmatmul.bf16.gmra.mxu0 %v1443
    %v1454 = vpop.f32.mrf.mxu0
    %v1455 = vadd.f32 0.0, %v1454
    %v1456 = vpop.f32.mrf.mxu0
    %1457 = vdwg.mxu0
    %v1459 = vsel %vm268, %v1165, 0
    %1461 = vmatpush.bf16.msra.mxu0 0
    %1462 = vmatpush.bf16.msra.mxu0 0
    %1463 = vmatpush.bf16.msra.mxu0 0
    %1464 = vmatpush.bf16.msra.mxu0 0
    %1465 = vmatpush.bf16.msra.mxu0 0
    %1466 = vmatpush.bf16.msra.mxu0 0
    %1467 = vmatpush.bf16.msra.mxu0 0
    %1468 = vmatpush.bf16.msra.mxu0 %v1357
    %1469 = vmatmul.bf16.gmra.mxu0 %v1459
    %v1470 = vpop.f32.mrf.mxu0
    %v1471 = vadd.f32 %v1455, %v1470
    %v1472 = vpop.f32.mrf.mxu0
    %1473 = vdwg.mxu0
    %v1474 = vld [vmem:[%s4 + $0x15] sm:$0x1]
    %v1475 = vperm.slane %v1474, 0
    %v1476 = vadd.f32 %v1372, %v1475
    %v1477 = vadd.f32 %v1471, %v1475
    %v1478 = vadd.f32 %v1476, %v928
    %v1479 = vadd.f32 %v1477, %v929
    %v1480 = vsel %vm98, %v1478, 0.0
    %1481 = vadd.xlane.f32.xlu0 %v1480
    %v1482 = vpop.xlane.xlu0 %1481
    %v1483 = vsel %vm98, %v1479, 0.0
    %1484 = vadd.xlane.f32.xlu0 %v1483
    %v1485 = vpop.xlane.xlu0 %1484
    %v1486 = vmul.f32 %v1482, %v111
    %v1487 = vmul.f32 %v1485, %v111
    %v1488 = vsub.f32 %v1478, %v1486
    %v1489 = vsub.f32 %v1479, %v1487
    %v1490 = vmul.f32 %v1488, %v1488
    %v1491 = vmul.f32 %v1489, %v1489
    %v1492 = vsel %vm98, %v1490, 0.0
    %1493 = vadd.xlane.f32.xlu0 %v1492
    %v1494 = vpop.xlane.xlu0 %1493
    %v1495 = vsel %vm98, %v1491, 0.0
    %1496 = vadd.xlane.f32.xlu0 %v1495
    %v1497 = vpop.xlane.xlu0 %1496
    %v1498 = vmul.f32 %v1494, %v111
    %v1499 = vmul.f32 %v1497, %v111
    %v1500 = vadd.f32 %v1498, 1e-12
    %v1501 = vadd.f32 %v1499, 1e-12
    %v1502 = vrsqrt.pop %v1500
    %v1503 = vmul.f32 %v1502, %v1500
    %v1504 = vmul.f32 %v1503, %v1502
    %v1505 = vmul.f32 0.5, %v1504
    %v1506 = vsub.f32 1.5, %v1505
    %v1507 = vmul.f32 %v1502, %v1506
    %vm1508 = vweird.f32 %v1500
    %vm1509 = vweird.f32 %v1502
    %vm1510 = vmor %vm1508, %vm1509
    %v1511 = vsel %vm1510, %v1502, %v1507
    %v1512 = vrsqrt.pop %v1501
    %v1513 = vmul.f32 %v1512, %v1501
    %v1514 = vmul.f32 %v1513, %v1512
    %v1515 = vmul.f32 0.5, %v1514
    %v1516 = vsub.f32 1.5, %v1515
    %v1517 = vmul.f32 %v1512, %v1516
    %vm1518 = vweird.f32 %v1501
    %vm1519 = vweird.f32 %v1512
    %vm1520 = vmor %vm1518, %vm1519
    %v1521 = vsel %vm1520, %v1512, %v1517
    %v1522 = vmul.f32 %v1488, %v1511
    %v1523 = vmul.f32 %v1489, %v1521
    %v1524 = vld [vmem:[%s4 + $0x16] sm:$0x1]
    %v1525 = vperm.slane %v1524, 0
    %v1526 = vmul.f32 %v1522, %v1525
    %v1527 = vmul.f32 %v1523, %v1525
    %v1528 = vld [vmem:[%s4 + $0x17] sm:$0x1]
    %v1529 = vperm.slane %v1528, 0
    %v1530 = vadd.f32 %v1526, %v1529
    %v1531 = vadd.f32 %v1527, %v1529
    %v1532 = vld [vmem:[%s3 + $0x110] sm:$0xf]
    %v1533 = vld [vmem:[%s3 + $0x114] sm:$0xf]
    %v1534 = vld [vmem:[%s3 + $0x118] sm:$0xf]
    %v1535 = vld [vmem:[%s3 + $0x11c] sm:$0xf]
    %v1536 = vld [vmem:[%s3 + $0x120] sm:$0xf]
    %v1537 = vld [vmem:[%s3 + $0x124] sm:$0xf]
    %v1538 = vld [vmem:[%s3 + $0x128] sm:$0xf]
    %v1539 = vld [vmem:[%s3 + $0x12c] sm:$0xf]
    %v1540 = vld [vmem:[%s3 + $0x130] sm:$0xf]
    %v1541 = vld [vmem:[%s3 + $0x134] sm:$0xf]
    %v1542 = vld [vmem:[%s3 + $0x138] sm:$0xf]
    %v1543 = vld [vmem:[%s3 + $0x13c] sm:$0xf]
    %v1544 = vpack.c.bf16 %v1531, %v1530
    %v1545 = vld [vmem:[%s4 + $0x18] sm:$0x1]
    %v1546 = vperm.slane %v1545, 0
    %v1551 = vunpack.c.l.b16 %v1532
    %v1552 = vunpack.c.l.b16 %v1533
    %v1553 = vunpack.c.l.b16 %v1534
    %v1554 = vunpack.c.l.b16 %v1535
    %v1555 = vpack.c.b16 %v1552, %v1551
    %v1556 = vpack.c.b16 %v1554, %v1553
    %v1560 = vsel %vm98, %v1544, 0
    %1562 = vmatpush.bf16.msra.mxu0 0
    %1563 = vmatpush.bf16.msra.mxu0 0
    %1564 = vmatpush.bf16.msra.mxu0 0
    %1565 = vmatpush.bf16.msra.mxu0 0
    %1566 = vmatpush.bf16.msra.mxu0 0
    %1567 = vmatpush.bf16.msra.mxu0 0
    %1568 = vmatpush.bf16.msra.mxu0 %v1556
    %1569 = vmatpush.bf16.msra.mxu0 %v1555
    %1570 = vmatmul.bf16.gmra.mxu0 %v1560
    %v1571 = vpop.f32.mrf.mxu0
    %v1572 = vadd.f32 %v1546, %v1571
    %v1573 = vpop.f32.mrf.mxu0
    %v1574 = vadd.f32 %v1546, %v1573
    %1575 = vdwg.mxu0
    %v1576 = vmul.f32 %v1572, 0.5
    %v1577 = vmul.f32 %v1574, 0.5
    %v1578 = vmul.f32 %v1572, 0.044715
    %v1579 = vmul.f32 %v1574, 0.044715
    %v1580 = vmul.f32 %v1578, %v1572
    %v1581 = vmul.f32 %v1579, %v1574
    %v1582 = vmul.f32 %v1580, %v1572
    %v1583 = vmul.f32 %v1581, %v1574
    %v1584 = vadd.f32 %v1572, %v1582
    %v1585 = vadd.f32 %v1574, %v1583
    %v1586 = vmul.f32 %v1584, 0.7978846
    %v1587 = vmul.f32 %v1585, 0.7978846
    %v1588 = vtanh.pop %v1586
    %v1589 = vtanh.pop %v1587
    %v1590 = vadd.f32 %v1588, 1.0
    %v1591 = vadd.f32 %v1589, 1.0
    %v1592 = vmul.f32 %v1576, %v1590
    %v1593 = vmul.f32 %v1577, %v1591
    %v1594 = vpack.c.bf16 %v1593, %v1592
    %v1595 = vld [vmem:[%s4 + $0x19] sm:$0x1]
    %v1596 = vperm.slane %v1595, 0
    %v1605 = vunpack.c.l.b16 %v1536
    %v1606 = vunpack.c.l.b16 %v1537
    %v1607 = vunpack.c.l.b16 %v1538
    %v1608 = vunpack.c.l.b16 %v1539
    %v1609 = vunpack.c.l.b16 %v1540
    %v1610 = vunpack.c.l.b16 %v1541
    %v1611 = vunpack.c.l.b16 %v1542
    %v1612 = vunpack.c.l.b16 %v1543
    %v1613 = vpack.c.b16 %v1606, %v1605
    %v1614 = vpack.c.b16 %v1608, %v1607
    %v1615 = vpack.c.b16 %v1610, %v1609
    %v1616 = vpack.c.b16 %v1612, %v1611
    %v1622 = vsel %vm858, %v1594, 0
    %1624 = vmatpush.bf16.msra.mxu0 0
    %1625 = vmatpush.bf16.msra.mxu0 0
    %1626 = vmatpush.bf16.msra.mxu0 0
    %1627 = vmatpush.bf16.msra.mxu0 0
    %1628 = vmatpush.bf16.msra.mxu0 %v1616
    %1629 = vmatpush.bf16.msra.mxu0 %v1615
    %1630 = vmatpush.bf16.msra.mxu0 %v1614
    %1631 = vmatpush.bf16.msra.mxu0 %v1613
    %1632 = vmatmul.bf16.gmra.mxu0 %v1622
    %v1633 = vpop.f32.mrf.mxu0
    %v1634 = vadd.f32 %v1596, %v1633
    %v1635 = vpop.f32.mrf.mxu0
    %v1636 = vadd.f32 %v1596, %v1635
    %1637 = vdwg.mxu0
    %v1638 = vadd.f32 %v1634, %v1530
    %v1639 = vadd.f32 %v1636, %v1531
    %v1640 = vsel %vm98, %v1638, 0.0
    %1641 = vadd.xlane.f32.xlu0 %v1640
    %v1642 = vpop.xlane.xlu0 %1641
    %v1643 = vsel %vm98, %v1639, 0.0
    %1644 = vadd.xlane.f32.xlu0 %v1643
    %v1645 = vpop.xlane.xlu0 %1644
    %v1646 = vmul.f32 %v1642, %v111
    %v1647 = vmul.f32 %v1645, %v111
    %v1648 = vsub.f32 %v1638, %v1646
    %v1649 = vsub.f32 %v1639, %v1647
    %v1650 = vmul.f32 %v1648, %v1648
    %v1651 = vmul.f32 %v1649, %v1649
    %v1652 = vsel %vm98, %v1650, 0.0
    %1653 = vadd.xlane.f32.xlu0 %v1652
    %v1654 = vpop.xlane.xlu0 %1653
    %v1655 = vsel %vm98, %v1651, 0.0
    %1656 = vadd.xlane.f32.xlu0 %v1655
    %v1657 = vpop.xlane.xlu0 %1656
    %v1658 = vmul.f32 %v1654, %v111
    %v1659 = vmul.f32 %v1657, %v111
    %v1660 = vadd.f32 %v1658, 1e-12
    %v1661 = vadd.f32 %v1659, 1e-12
    %v1662 = vrsqrt.pop %v1660
    %v1663 = vmul.f32 %v1662, %v1660
    %v1664 = vmul.f32 %v1663, %v1662
    %v1665 = vmul.f32 0.5, %v1664
    %v1666 = vsub.f32 1.5, %v1665
    %v1667 = vmul.f32 %v1662, %v1666
    %vm1668 = vweird.f32 %v1660
    %vm1669 = vweird.f32 %v1662
    %vm1670 = vmor %vm1668, %vm1669
    %v1671 = vsel %vm1670, %v1662, %v1667
    %v1672 = vrsqrt.pop %v1661
    %v1673 = vmul.f32 %v1672, %v1661
    %v1674 = vmul.f32 %v1673, %v1672
    %v1675 = vmul.f32 0.5, %v1674
    %v1676 = vsub.f32 1.5, %v1675
    %v1677 = vmul.f32 %v1672, %v1676
    %vm1678 = vweird.f32 %v1661
    %vm1679 = vweird.f32 %v1672
    %vm1680 = vmor %vm1678, %vm1679
    %v1681 = vsel %vm1680, %v1672, %v1677
    %v1682 = vmul.f32 %v1648, %v1671
    %v1683 = vmul.f32 %v1649, %v1681
    %v1684 = vld [vmem:[%s4 + $0x1a] sm:$0x1]
    %v1685 = vperm.slane %v1684, 0
    %v1686 = vmul.f32 %v1682, %v1685
    %v1687 = vmul.f32 %v1683, %v1685
    %v1688 = vld [vmem:[%s4 + $0x1b] sm:$0x1]
    %v1689 = vperm.slane %v1688, 0
    %v1690 = vadd.f32 %v1686, %v1689
    %v1691 = vadd.f32 %v1687, %v1689
    %1692 = vst.msk [vmem:[#allocation5] sm:$0xff] %vm98, %v1690
    %1693 = vst.msk [vmem:[#allocation5 + $0x8] sm:$0xff] %vm98, %v1691
    // Predicated region
    $region18: #{bert_text_processor.1} parent=1 // pred_check
      _
    $region19: #{bert_text_processor.1} parent=1 // pred_check_branch
      %1695 = sbr.rel (0) target = $region21
    $region20: #{bert_text_processor.1} parent=1 // pred_region
      %1697 = vsyncadd [#allocation6], 0
      %s1698 = sshll.u32 [#allocation5], 4
      %s1699 = int_to_ptr.vmem [resolvable:$true] %s1698
      %s1700 = sshll.u32 %s5, 4
      %s1701 = int_to_ptr.hbm [resolvable:$true] %s1700
      %1706 = dma.vmem_to_hbm [thread:$0]  %s1699, 256, %s1701, [#allocation6], 128, 128, 8
    $region21: #{bert_text_processor.1} parent=1 // pred_fallthru
      _
    // Predicated region
    $region22: #{bert_text_processor.1} parent=1 // pred_check
      _
    $region23: #{bert_text_processor.1} parent=1 // pred_check_branch
      %1708 = sbr.rel (0) target = $region25
    $region24: #{bert_text_processor.1} parent=1 // pred_region
      %1710 = dma.done [#allocation6], 256
    $region25: #{bert_text_processor.1} parent=1 // pred_fallthru
      _
    %1711 = vsyncpa [#allocation6], 1

</llo_original>
